<compile_context>
chip_gen: v7x
topology: tpu7x:2x2x1
jax: 0.10.0
libtpu: 0.0.40
codegen_flags: <defaults>
</compile_context>

<pallas_src>
import jax
import jax.numpy as jnp
from jax.experimental import pallas as pl
from jax.experimental.pallas import tpu as pltpu


# ---------------------------------------------------------------------------
# Fused kernel: embedding-gather + LSTMCell step + fc projection
# ---------------------------------------------------------------------------
def decoder_step_kernel(ids_gt_ref, ids_pr_ref,            # SMEM (B,) int32
                        tab_gt_hbm, tab_pr_hbm,            # HBM  (V, 4H) f32 gate tables (bias folded)
                        w_hh_ref,                          # VMEM (H, 4H) bf16
                        w_fc_ref, b_fc_ref,                # VMEM (H, V) bf16, (1, V) f32
                        h_ref, c_ref,                      # VMEM (B, H) f32
                        scores_ref, h_out_ref, c_out_ref,  # VMEM outputs
                        gbuf_gt, gbuf_pr, sems):           # scratch
    B, H = h_ref.shape

    # Gather one precomputed gate-contribution row per batch element from HBM.
    # All copies for a table signal the SAME DMA semaphore -> one wait per table.
    for b in range(B):
        pltpu.make_async_copy(tab_gt_hbm.at[ids_gt_ref[b]], gbuf_gt.at[b],
                              sems.at[0]).start()
        pltpu.make_async_copy(tab_pr_hbm.at[ids_pr_ref[b]], gbuf_pr.at[b],
                              sems.at[1]).start()

    # Hidden-state matmul overlaps with the in-flight gather DMAs.
    # bf16 MXU operands, f32 accumulation.
    hh = jnp.dot(h_ref[...].astype(jnp.bfloat16), w_hh_ref[...],
                 preferred_element_type=jnp.float32)

    # Single wait per table: the (B, 4H) dummy descriptor consumes exactly the
    # B * 4H * 4 bytes signalled by the B row copies above.
    pltpu.make_async_copy(tab_gt_hbm.at[pl.ds(0, B)], gbuf_gt, sems.at[0]).wait()
    pltpu.make_async_copy(tab_pr_hbm.at[pl.ds(0, B)], gbuf_pr, sems.at[1]).wait()

    # Biases (b_ih + b_hh) were pre-folded into gate_tab_gt at preprocess time.
    gates = gbuf_gt[...] + gbuf_pr[...] + hh

    # Gate order pre-permuted to [i, f, o, g]:
    #   one sigmoid over a contiguous 3H slab, one tanh over the trailing H slab.
    ifo = jax.nn.sigmoid(gates[:, : 3 * H])
    g = jnp.tanh(gates[:, 3 * H:])
    i_g = ifo[:, 0 * H:1 * H]
    f_g = ifo[:, 1 * H:2 * H]
    o_g = ifo[:, 2 * H:3 * H]

    c_new = f_g * c_ref[...] + i_g * g
    h_new = o_g * jnp.tanh(c_new)

    # TODO(synk): nn.Dropout(p=0.5) is identity in eval mode; training-mode
    # dropout (PRNG mask via pltpu.prng_*) intentionally omitted.
    h_out_ref[...] = h_new.astype(h_out_ref.dtype)
    c_out_ref[...] = c_new.astype(c_out_ref.dtype)

    # Fused fc projection: scores = h_new @ W_fc.T + b_fc (bf16 MXU, f32 acc).
    scores_ref[...] = (
        jnp.dot(h_new.astype(jnp.bfloat16), w_fc_ref[...],
                preferred_element_type=jnp.float32)
        + b_fc_ref[...]
    ).astype(scores_ref.dtype)


# ---------------------------------------------------------------------------
# One-time parameter preprocessing (hoisted out of the per-token call)
# ---------------------------------------------------------------------------
def preprocess_decoder_params(params, matmul_weight_dtype=jnp.bfloat16):
    emb = params["embedding"]            # (V, E)
    V, E = emb.shape
    w_ih = params["w_ih"]                # (4H, 2E)  torch gate order [i, f, g, o]
    w_hh = params["w_hh"]                # (4H, H)
    H = w_hh.shape[1]

    def to_ifog(m):                      # reorder gate blocks i,f,g,o -> i,f,o,g
        i, f, g, o = jnp.split(m, 4, axis=0)
        return jnp.concatenate([i, f, o, g], axis=0)

    w_ih_r = to_ifog(w_ih)
    w_hh_r = to_ifog(w_hh)
    b_gates = to_ifog(params["b_ih"] + params["b_hh"]).reshape(1, 4 * H)

    # Fold embedding lookup + input-to-hidden matmul (and biases) into gather
    # tables:  gate_tab_gt[v] = embedding[v] @ W_ih[:, :E].T + (b_ih + b_hh)
    gate_tab_gt = emb @ w_ih_r[:, :E].T + b_gates      # (V, 4H)
    gate_tab_pr = emb @ w_ih_r[:, E:].T                # (V, 4H)

    return {
        "gate_tab_gt": gate_tab_gt.astype(jnp.float32),        # stays in HBM
        "gate_tab_pr": gate_tab_pr.astype(jnp.float32),        # stays in HBM
        "w_hh_t": w_hh_r.T.astype(matmul_weight_dtype),        # (H, 4H)
        "w_fc_t": params["w_fc"].T.astype(matmul_weight_dtype),  # (H, V)
        "b_fc": params["b_fc"].reshape(1, V).astype(jnp.float32),
    }


# ---------------------------------------------------------------------------
# Per-token forward (mirrors Decoder.forward; encoder_out unused, as in torch)
# ---------------------------------------------------------------------------
@jax.jit
def decoder_forward(word_gt, word_pred, encoder_out, h, c, packed):
    del encoder_out                       # unused by Decoder.forward
    B, H = h.shape
    V = packed["w_fc_t"].shape[1]

    # Clamp ids for OOB safety (out-of-range ids would otherwise gather garbage).
    ids_gt = jnp.clip(word_gt.astype(jnp.int32), 0, V - 1)
    ids_pr = jnp.clip(word_pred.astype(jnp.int32), 0, V - 1)

    w_dtype_bytes = jnp.dtype(packed["w_fc_t"].dtype).itemsize
    cost = pl.CostEstimate(
        flops=2 * B * H * 4 * H + 2 * B * H * V,
        transcendentals=5 * B * H,
        bytes_accessed=(2 * B * 4 * H * 4                 # gathered gate rows
                        + H * 4 * H * w_dtype_bytes       # w_hh_t
                        + H * V * w_dtype_bytes           # w_fc_t
                        + V * 4                           # b_fc
                        + 4 * B * H * 4                   # h, c in + out
                        + B * V * 4))                     # scores out

    scores, h_new, c_new = pl.pallas_call(
        decoder_step_kernel,
        out_shape=(jax.ShapeDtypeStruct((B, V), jnp.float32),
                   jax.ShapeDtypeStruct((B, H), jnp.float32),
                   jax.ShapeDtypeStruct((B, H), jnp.float32)),
        in_specs=[
            pl.BlockSpec(memory_space=pltpu.MemorySpace.SMEM),   # ids_gt
            pl.BlockSpec(memory_space=pltpu.MemorySpace.SMEM),   # ids_pr
            pl.BlockSpec(memory_space=pl.ANY),                   # gate_tab_gt (HBM)
            pl.BlockSpec(memory_space=pl.ANY),                   # gate_tab_pr (HBM)
            pl.BlockSpec(memory_space=pltpu.MemorySpace.VMEM),   # w_hh_t
            pl.BlockSpec(memory_space=pltpu.MemorySpace.VMEM),   # w_fc_t
            pl.BlockSpec(memory_space=pltpu.MemorySpace.VMEM),   # b_fc
            pl.BlockSpec(memory_space=pltpu.MemorySpace.VMEM),   # h
            pl.BlockSpec(memory_space=pltpu.MemorySpace.VMEM),   # c
        ],
        out_specs=(pl.BlockSpec(memory_space=pltpu.MemorySpace.VMEM),
                   pl.BlockSpec(memory_space=pltpu.MemorySpace.VMEM),
                   pl.BlockSpec(memory_space=pltpu.MemorySpace.VMEM)),
        scratch_shapes=[
            pltpu.VMEM((B, 4 * H), jnp.float32),     # gathered gt contributions
            pltpu.VMEM((B, 4 * H), jnp.float32),     # gathered pred contributions
            pltpu.SemaphoreType.DMA((2,)),           # one sem per table
        ],
        input_output_aliases={7: 1, 8: 2},           # h -> h_out, c -> c_out
        cost_estimate=cost,
        compiler_params=pltpu.CompilerParams(vmem_limit_bytes=32 * 1024 * 1024),
    )(ids_gt, ids_pr,
      packed["gate_tab_gt"], packed["gate_tab_pr"],
      packed["w_hh_t"], packed["w_fc_t"], packed["b_fc"], h, c)

    return scores, h_new, c_new


# ---------------------------------------------------------------------------
# Pure-JAX reference matching PyTorch semantics (eval mode, f32)
# ---------------------------------------------------------------------------
def _reference_forward(word_gt, word_pred, h, c, params):
    H = h.shape[1]
    x = jnp.concatenate(
        [params["embedding"][word_gt], params["embedding"][word_pred]], axis=1)
    gates = (x @ params["w_ih"].T + params["b_ih"]
             + h @ params["w_hh"].T + params["b_hh"])
    i = jax.nn.sigmoid(gates[:, 0 * H:1 * H])
    f = jax.nn.sigmoid(gates[:, 1 * H:2 * H])
    g = jnp.tanh(gates[:, 2 * H:3 * H])
    o = jax.nn.sigmoid(gates[:, 3 * H:4 * H])
    c_new = f * c + i * g
    h_new = o * jnp.tanh(c_new)
    scores = h_new @ params["w_fc"].T + params["b_fc"]
    return scores, h_new, c_new


if __name__ == "__main__":
    # Small, lane-friendly shapes consistent with the module.
    B = 8            # batch
    E = 64           # embed_dim
    H = 128          # decoder_dim
    V = 512          # vocab_size
    ENC_DIM = 256    # encoder_dim (encoder_out unused in forward)
    NUM_PIX = 16

    key = jax.random.PRNGKey(0)
    ks = jax.random.split(key, 10)
    bound = 1.0 / jnp.sqrt(H)

    params = {
        "embedding": jax.random.normal(ks[0], (V, E), jnp.float32),
        # nn.LSTMCell(input_size=2E, hidden_size=H): weight_ih (4H, 2E), weight_hh (4H, H)
        "w_ih": jax.random.uniform(ks[1], (4 * H, 2 * E), jnp.float32, -bound, bound),
        "w_hh": jax.random.uniform(ks[2], (4 * H, H), jnp.float32, -bound, bound),
        "b_ih": jax.random.uniform(ks[3], (4 * H,), jnp.float32, -bound, bound),
        "b_hh": jax.random.uniform(ks[4], (4 * H,), jnp.float32, -bound, bound),
        # fc: weight uniform(-0.1, 0.1), bias zero (init_weights)
        "w_fc": jax.random.uniform(ks[5], (V, H), jnp.float32, -0.1, 0.1),
        "b_fc": jnp.zeros((V,), jnp.float32),
    }

    word_gt = jax.random.randint(ks[6], (B,), 0, V, jnp.int32)
    word_pred = jax.random.randint(ks[7], (B,), 0, V, jnp.int32)
    encoder_out = jax.random.normal(ks[8], (B, NUM_PIX, ENC_DIM), jnp.float32)
    h0 = jax.random.normal(ks[9], (B, H), jnp.float32) * 0.1
    c0 = jax.random.normal(ks[0], (B, H), jnp.float32) * 0.1

    # One-time weight packing (NOT part of the per-token path).
    packed = jax.tree_util.tree_map(jax.block_until_ready,
                                    preprocess_decoder_params(params))

    scores, h_new, c_new = decoder_forward(word_gt, word_pred, encoder_out,
                                           h0, c0, packed)
    jax.block_until_ready((scores, h_new, c_new))

    ref_scores, ref_h, ref_c = _reference_forward(word_gt, word_pred, h0, c0, params)
    assert scores.shape == (B, V) and h_new.shape == (B, H) and c_new.shape == (B, H)
    # Tolerances account for bf16 MXU weight operands (f32 accumulation / elementwise).
    assert jnp.allclose(h_new, ref_h, atol=1e-2, rtol=1e-2)
    assert jnp.allclose(c_new, ref_c, atol=1e-2, rtol=1e-2)
    assert jnp.allclose(scores, ref_scores, atol=3e-2, rtol=3e-2)

    print("KERNEL_OK")
</pallas_src>

<mosaic_0001>
module attributes {stable_mosaic.version = 11 : i64} {
  func.func @decoder_step_kernel(%arg0: memref<8xi32, #tpu.memory_space<smem>>, %arg1: memref<8xi32, #tpu.memory_space<smem>>, %arg2: memref<512x512xf32, #tpu.memory_space<any>>, %arg3: memref<512x512xf32, #tpu.memory_space<any>>, %arg4: memref<128x512xbf16, #tpu.memory_space<vmem>>, %arg5: memref<128x512xbf16, #tpu.memory_space<vmem>>, %arg6: memref<1x512xf32, #tpu.memory_space<vmem>>, %arg7: memref<8x128xf32, #tpu.memory_space<vmem>>, %arg8: memref<8x128xf32, #tpu.memory_space<vmem>>, %arg9: memref<8x512xf32, #tpu.memory_space<vmem>>, %arg10: memref<8x128xf32, #tpu.memory_space<vmem>>, %arg11: memref<8x128xf32, #tpu.memory_space<vmem>>, %arg12: memref<8x512xf32, #tpu.memory_space<vmem>>, %arg13: memref<8x512xf32, #tpu.memory_space<vmem>>, %arg14: memref<2x!tpu.dma_semaphore, #tpu.memory_space<semaphore_mem>>) attributes {dimension_semantics = [], scalar_prefetch = 0 : i64, scratch_operands = 3 : i64, tpu.core_type = #tpu.core_type<tc>} {
    %c0 = arith.constant 0 : index
    %0 = memref.load %arg0[%c0] : memref<8xi32, #tpu.memory_space<smem>>
    %c0_i32 = arith.constant 0 : i32
    %c0_i32_0 = arith.constant 0 : i32
    %c0_i32_1 = arith.constant 0 : i32
    %1 = tpu.memref_slice %arg2[%0, %c0_i32_1] : memref<512x512xf32, #tpu.memory_space<any>> -> memref<1x512xf32, #tpu.memory_space<any>>
    %2 = tpu.memref_squeeze %1 : memref<1x512xf32, #tpu.memory_space<any>> -> memref<512xf32, #tpu.memory_space<any>>
    %c0_i32_2 = arith.constant 0 : i32
    %3 = tpu.memref_slice %arg12[%c0_i32, %c0_i32_2] : memref<8x512xf32, #tpu.memory_space<vmem>> -> memref<1x512xf32, #tpu.memory_space<vmem>>
    %4 = tpu.memref_squeeze %3 : memref<1x512xf32, #tpu.memory_space<vmem>> -> memref<512xf32, #tpu.memory_space<vmem>>
    %5 = tpu.memref_slice %arg14[%c0_i32_0] : memref<2x!tpu.dma_semaphore, #tpu.memory_space<semaphore_mem>> -> memref<1x!tpu.dma_semaphore, #tpu.memory_space<semaphore_mem>>
    %6 = tpu.memref_squeeze %5 : memref<1x!tpu.dma_semaphore, #tpu.memory_space<semaphore_mem>> -> memref<!tpu.dma_semaphore, #tpu.memory_space<semaphore_mem>>
    tpu.enqueue_dma source(%2 : memref<512xf32, #tpu.memory_space<any>>) target(%4 : memref<512xf32, #tpu.memory_space<vmem>>) target_semaphore(%6 : memref<!tpu.dma_semaphore, #tpu.memory_space<semaphore_mem>>)
    %c0_3 = arith.constant 0 : index
    %7 = memref.load %arg1[%c0_3] : memref<8xi32, #tpu.memory_space<smem>>
    %c0_i32_4 = arith.constant 0 : i32
    %c1_i32 = arith.constant 1 : i32
    %c0_i32_5 = arith.constant 0 : i32
    %8 = tpu.memref_slice %arg3[%7, %c0_i32_5] : memref<512x512xf32, #tpu.memory_space<any>> -> memref<1x512xf32, #tpu.memory_space<any>>
    %9 = tpu.memref_squeeze %8 : memref<1x512xf32, #tpu.memory_space<any>> -> memref<512xf32, #tpu.memory_space<any>>
    %c0_i32_6 = arith.constant 0 : i32
    %10 = tpu.memref_slice %arg13[%c0_i32_4, %c0_i32_6] : memref<8x512xf32, #tpu.memory_space<vmem>> -> memref<1x512xf32, #tpu.memory_space<vmem>>
    %11 = tpu.memref_squeeze %10 : memref<1x512xf32, #tpu.memory_space<vmem>> -> memref<512xf32, #tpu.memory_space<vmem>>
    %12 = tpu.memref_slice %arg14[%c1_i32] : memref<2x!tpu.dma_semaphore, #tpu.memory_space<semaphore_mem>> -> memref<1x!tpu.dma_semaphore, #tpu.memory_space<semaphore_mem>>
    %13 = tpu.memref_squeeze %12 : memref<1x!tpu.dma_semaphore, #tpu.memory_space<semaphore_mem>> -> memref<!tpu.dma_semaphore, #tpu.memory_space<semaphore_mem>>
    tpu.enqueue_dma source(%9 : memref<512xf32, #tpu.memory_space<any>>) target(%11 : memref<512xf32, #tpu.memory_space<vmem>>) target_semaphore(%13 : memref<!tpu.dma_semaphore, #tpu.memory_space<semaphore_mem>>)
    %c1 = arith.constant 1 : index
    %14 = memref.load %arg0[%c1] : memref<8xi32, #tpu.memory_space<smem>>
    %c1_i32_7 = arith.constant 1 : i32
    %c0_i32_8 = arith.constant 0 : i32
    %c0_i32_9 = arith.constant 0 : i32
    %15 = tpu.memref_slice %arg2[%14, %c0_i32_9] : memref<512x512xf32, #tpu.memory_space<any>> -> memref<1x512xf32, #tpu.memory_space<any>>
    %16 = tpu.memref_squeeze %15 : memref<1x512xf32, #tpu.memory_space<any>> -> memref<512xf32, #tpu.memory_space<any>>
    %c0_i32_10 = arith.constant 0 : i32
    %17 = tpu.memref_slice %arg12[%c1_i32_7, %c0_i32_10] : memref<8x512xf32, #tpu.memory_space<vmem>> -> memref<1x512xf32, #tpu.memory_space<vmem>>
    %18 = tpu.memref_squeeze %17 : memref<1x512xf32, #tpu.memory_space<vmem>> -> memref<512xf32, #tpu.memory_space<vmem>>
    %19 = tpu.memref_slice %arg14[%c0_i32_8] : memref<2x!tpu.dma_semaphore, #tpu.memory_space<semaphore_mem>> -> memref<1x!tpu.dma_semaphore, #tpu.memory_space<semaphore_mem>>
    %20 = tpu.memref_squeeze %19 : memref<1x!tpu.dma_semaphore, #tpu.memory_space<semaphore_mem>> -> memref<!tpu.dma_semaphore, #tpu.memory_space<semaphore_mem>>
    tpu.enqueue_dma source(%16 : memref<512xf32, #tpu.memory_space<any>>) target(%18 : memref<512xf32, #tpu.memory_space<vmem>>) target_semaphore(%20 : memref<!tpu.dma_semaphore, #tpu.memory_space<semaphore_mem>>)
    %c1_11 = arith.constant 1 : index
    %21 = memref.load %arg1[%c1_11] : memref<8xi32, #tpu.memory_space<smem>>
    %c1_i32_12 = arith.constant 1 : i32
    %c1_i32_13 = arith.constant 1 : i32
    %c0_i32_14 = arith.constant 0 : i32
    %22 = tpu.memref_slice %arg3[%21, %c0_i32_14] : memref<512x512xf32, #tpu.memory_space<any>> -> memref<1x512xf32, #tpu.memory_space<any>>
    %23 = tpu.memref_squeeze %22 : memref<1x512xf32, #tpu.memory_space<any>> -> memref<512xf32, #tpu.memory_space<any>>
    %c0_i32_15 = arith.constant 0 : i32
    %24 = tpu.memref_slice %arg13[%c1_i32_12, %c0_i32_15] : memref<8x512xf32, #tpu.memory_space<vmem>> -> memref<1x512xf32, #tpu.memory_space<vmem>>
    %25 = tpu.memref_squeeze %24 : memref<1x512xf32, #tpu.memory_space<vmem>> -> memref<512xf32, #tpu.memory_space<vmem>>
    %26 = tpu.memref_slice %arg14[%c1_i32_13] : memref<2x!tpu.dma_semaphore, #tpu.memory_space<semaphore_mem>> -> memref<1x!tpu.dma_semaphore, #tpu.memory_space<semaphore_mem>>
    %27 = tpu.memref_squeeze %26 : memref<1x!tpu.dma_semaphore, #tpu.memory_space<semaphore_mem>> -> memref<!tpu.dma_semaphore, #tpu.memory_space<semaphore_mem>>
    tpu.enqueue_dma source(%23 : memref<512xf32, #tpu.memory_space<any>>) target(%25 : memref<512xf32, #tpu.memory_space<vmem>>) target_semaphore(%27 : memref<!tpu.dma_semaphore, #tpu.memory_space<semaphore_mem>>)
    %c2 = arith.constant 2 : index
    %28 = memref.load %arg0[%c2] : memref<8xi32, #tpu.memory_space<smem>>
    %c2_i32 = arith.constant 2 : i32
    %c0_i32_16 = arith.constant 0 : i32
    %c0_i32_17 = arith.constant 0 : i32
    %29 = tpu.memref_slice %arg2[%28, %c0_i32_17] : memref<512x512xf32, #tpu.memory_space<any>> -> memref<1x512xf32, #tpu.memory_space<any>>
    %30 = tpu.memref_squeeze %29 : memref<1x512xf32, #tpu.memory_space<any>> -> memref<512xf32, #tpu.memory_space<any>>
    %c0_i32_18 = arith.constant 0 : i32
    %31 = tpu.memref_slice %arg12[%c2_i32, %c0_i32_18] : memref<8x512xf32, #tpu.memory_space<vmem>> -> memref<1x512xf32, #tpu.memory_space<vmem>>
    %32 = tpu.memref_squeeze %31 : memref<1x512xf32, #tpu.memory_space<vmem>> -> memref<512xf32, #tpu.memory_space<vmem>>
    %33 = tpu.memref_slice %arg14[%c0_i32_16] : memref<2x!tpu.dma_semaphore, #tpu.memory_space<semaphore_mem>> -> memref<1x!tpu.dma_semaphore, #tpu.memory_space<semaphore_mem>>
    %34 = tpu.memref_squeeze %33 : memref<1x!tpu.dma_semaphore, #tpu.memory_space<semaphore_mem>> -> memref<!tpu.dma_semaphore, #tpu.memory_space<semaphore_mem>>
    tpu.enqueue_dma source(%30 : memref<512xf32, #tpu.memory_space<any>>) target(%32 : memref<512xf32, #tpu.memory_space<vmem>>) target_semaphore(%34 : memref<!tpu.dma_semaphore, #tpu.memory_space<semaphore_mem>>)
    %c2_19 = arith.constant 2 : index
    %35 = memref.load %arg1[%c2_19] : memref<8xi32, #tpu.memory_space<smem>>
    %c2_i32_20 = arith.constant 2 : i32
    %c1_i32_21 = arith.constant 1 : i32
    %c0_i32_22 = arith.constant 0 : i32
    %36 = tpu.memref_slice %arg3[%35, %c0_i32_22] : memref<512x512xf32, #tpu.memory_space<any>> -> memref<1x512xf32, #tpu.memory_space<any>>
    %37 = tpu.memref_squeeze %36 : memref<1x512xf32, #tpu.memory_space<any>> -> memref<512xf32, #tpu.memory_space<any>>
    %c0_i32_23 = arith.constant 0 : i32
    %38 = tpu.memref_slice %arg13[%c2_i32_20, %c0_i32_23] : memref<8x512xf32, #tpu.memory_space<vmem>> -> memref<1x512xf32, #tpu.memory_space<vmem>>
    %39 = tpu.memref_squeeze %38 : memref<1x512xf32, #tpu.memory_space<vmem>> -> memref<512xf32, #tpu.memory_space<vmem>>
    %40 = tpu.memref_slice %arg14[%c1_i32_21] : memref<2x!tpu.dma_semaphore, #tpu.memory_space<semaphore_mem>> -> memref<1x!tpu.dma_semaphore, #tpu.memory_space<semaphore_mem>>
    %41 = tpu.memref_squeeze %40 : memref<1x!tpu.dma_semaphore, #tpu.memory_space<semaphore_mem>> -> memref<!tpu.dma_semaphore, #tpu.memory_space<semaphore_mem>>
    tpu.enqueue_dma source(%37 : memref<512xf32, #tpu.memory_space<any>>) target(%39 : memref<512xf32, #tpu.memory_space<vmem>>) target_semaphore(%41 : memref<!tpu.dma_semaphore, #tpu.memory_space<semaphore_mem>>)
    %c3 = arith.constant 3 : index
    %42 = memref.load %arg0[%c3] : memref<8xi32, #tpu.memory_space<smem>>
    %c3_i32 = arith.constant 3 : i32
    %c0_i32_24 = arith.constant 0 : i32
    %c0_i32_25 = arith.constant 0 : i32
    %43 = tpu.memref_slice %arg2[%42, %c0_i32_25] : memref<512x512xf32, #tpu.memory_space<any>> -> memref<1x512xf32, #tpu.memory_space<any>>
    %44 = tpu.memref_squeeze %43 : memref<1x512xf32, #tpu.memory_space<any>> -> memref<512xf32, #tpu.memory_space<any>>
    %c0_i32_26 = arith.constant 0 : i32
    %45 = tpu.memref_slice %arg12[%c3_i32, %c0_i32_26] : memref<8x512xf32, #tpu.memory_space<vmem>> -> memref<1x512xf32, #tpu.memory_space<vmem>>
    %46 = tpu.memref_squeeze %45 : memref<1x512xf32, #tpu.memory_space<vmem>> -> memref<512xf32, #tpu.memory_space<vmem>>
    %47 = tpu.memref_slice %arg14[%c0_i32_24] : memref<2x!tpu.dma_semaphore, #tpu.memory_space<semaphore_mem>> -> memref<1x!tpu.dma_semaphore, #tpu.memory_space<semaphore_mem>>
    %48 = tpu.memref_squeeze %47 : memref<1x!tpu.dma_semaphore, #tpu.memory_space<semaphore_mem>> -> memref<!tpu.dma_semaphore, #tpu.memory_space<semaphore_mem>>
    tpu.enqueue_dma source(%44 : memref<512xf32, #tpu.memory_space<any>>) target(%46 : memref<512xf32, #tpu.memory_space<vmem>>) target_semaphore(%48 : memref<!tpu.dma_semaphore, #tpu.memory_space<semaphore_mem>>)
    %c3_27 = arith.constant 3 : index
    %49 = memref.load %arg1[%c3_27] : memref<8xi32, #tpu.memory_space<smem>>
    %c3_i32_28 = arith.constant 3 : i32
    %c1_i32_29 = arith.constant 1 : i32
    %c0_i32_30 = arith.constant 0 : i32
    %50 = tpu.memref_slice %arg3[%49, %c0_i32_30] : memref<512x512xf32, #tpu.memory_space<any>> -> memref<1x512xf32, #tpu.memory_space<any>>
    %51 = tpu.memref_squeeze %50 : memref<1x512xf32, #tpu.memory_space<any>> -> memref<512xf32, #tpu.memory_space<any>>
    %c0_i32_31 = arith.constant 0 : i32
    %52 = tpu.memref_slice %arg13[%c3_i32_28, %c0_i32_31] : memref<8x512xf32, #tpu.memory_space<vmem>> -> memref<1x512xf32, #tpu.memory_space<vmem>>
    %53 = tpu.memref_squeeze %52 : memref<1x512xf32, #tpu.memory_space<vmem>> -> memref<512xf32, #tpu.memory_space<vmem>>
    %54 = tpu.memref_slice %arg14[%c1_i32_29] : memref<2x!tpu.dma_semaphore, #tpu.memory_space<semaphore_mem>> -> memref<1x!tpu.dma_semaphore, #tpu.memory_space<semaphore_mem>>
    %55 = tpu.memref_squeeze %54 : memref<1x!tpu.dma_semaphore, #tpu.memory_space<semaphore_mem>> -> memref<!tpu.dma_semaphore, #tpu.memory_space<semaphore_mem>>
    tpu.enqueue_dma source(%51 : memref<512xf32, #tpu.memory_space<any>>) target(%53 : memref<512xf32, #tpu.memory_space<vmem>>) target_semaphore(%55 : memref<!tpu.dma_semaphore, #tpu.memory_space<semaphore_mem>>)
    %c4 = arith.constant 4 : index
    %56 = memref.load %arg0[%c4] : memref<8xi32, #tpu.memory_space<smem>>
    %c4_i32 = arith.constant 4 : i32
    %c0_i32_32 = arith.constant 0 : i32
    %c0_i32_33 = arith.constant 0 : i32
    %57 = tpu.memref_slice %arg2[%56, %c0_i32_33] : memref<512x512xf32, #tpu.memory_space<any>> -> memref<1x512xf32, #tpu.memory_space<any>>
    %58 = tpu.memref_squeeze %57 : memref<1x512xf32, #tpu.memory_space<any>> -> memref<512xf32, #tpu.memory_space<any>>
    %c0_i32_34 = arith.constant 0 : i32
    %59 = tpu.memref_slice %arg12[%c4_i32, %c0_i32_34] : memref<8x512xf32, #tpu.memory_space<vmem>> -> memref<1x512xf32, #tpu.memory_space<vmem>>
    %60 = tpu.memref_squeeze %59 : memref<1x512xf32, #tpu.memory_space<vmem>> -> memref<512xf32, #tpu.memory_space<vmem>>
    %61 = tpu.memref_slice %arg14[%c0_i32_32] : memref<2x!tpu.dma_semaphore, #tpu.memory_space<semaphore_mem>> -> memref<1x!tpu.dma_semaphore, #tpu.memory_space<semaphore_mem>>
    %62 = tpu.memref_squeeze %61 : memref<1x!tpu.dma_semaphore, #tpu.memory_space<semaphore_mem>> -> memref<!tpu.dma_semaphore, #tpu.memory_space<semaphore_mem>>
    tpu.enqueue_dma source(%58 : memref<512xf32, #tpu.memory_space<any>>) target(%60 : memref<512xf32, #tpu.memory_space<vmem>>) target_semaphore(%62 : memref<!tpu.dma_semaphore, #tpu.memory_space<semaphore_mem>>)
    %c4_35 = arith.constant 4 : index
    %63 = memref.load %arg1[%c4_35] : memref<8xi32, #tpu.memory_space<smem>>
    %c4_i32_36 = arith.constant 4 : i32
    %c1_i32_37 = arith.constant 1 : i32
    %c0_i32_38 = arith.constant 0 : i32
    %64 = tpu.memref_slice %arg3[%63, %c0_i32_38] : memref<512x512xf32, #tpu.memory_space<any>> -> memref<1x512xf32, #tpu.memory_space<any>>
    %65 = tpu.memref_squeeze %64 : memref<1x512xf32, #tpu.memory_space<any>> -> memref<512xf32, #tpu.memory_space<any>>
    %c0_i32_39 = arith.constant 0 : i32
    %66 = tpu.memref_slice %arg13[%c4_i32_36, %c0_i32_39] : memref<8x512xf32, #tpu.memory_space<vmem>> -> memref<1x512xf32, #tpu.memory_space<vmem>>
    %67 = tpu.memref_squeeze %66 : memref<1x512xf32, #tpu.memory_space<vmem>> -> memref<512xf32, #tpu.memory_space<vmem>>
    %68 = tpu.memref_slice %arg14[%c1_i32_37] : memref<2x!tpu.dma_semaphore, #tpu.memory_space<semaphore_mem>> -> memref<1x!tpu.dma_semaphore, #tpu.memory_space<semaphore_mem>>
    %69 = tpu.memref_squeeze %68 : memref<1x!tpu.dma_semaphore, #tpu.memory_space<semaphore_mem>> -> memref<!tpu.dma_semaphore, #tpu.memory_space<semaphore_mem>>
    tpu.enqueue_dma source(%65 : memref<512xf32, #tpu.memory_space<any>>) target(%67 : memref<512xf32, #tpu.memory_space<vmem>>) target_semaphore(%69 : memref<!tpu.dma_semaphore, #tpu.memory_space<semaphore_mem>>)
    %c5 = arith.constant 5 : index
    %70 = memref.load %arg0[%c5] : memref<8xi32, #tpu.memory_space<smem>>
    %c5_i32 = arith.constant 5 : i32
    %c0_i32_40 = arith.constant 0 : i32
    %c0_i32_41 = arith.constant 0 : i32
    %71 = tpu.memref_slice %arg2[%70, %c0_i32_41] : memref<512x512xf32, #tpu.memory_space<any>> -> memref<1x512xf32, #tpu.memory_space<any>>
    %72 = tpu.memref_squeeze %71 : memref<1x512xf32, #tpu.memory_space<any>> -> memref<512xf32, #tpu.memory_space<any>>
    %c0_i32_42 = arith.constant 0 : i32
    %73 = tpu.memref_slice %arg12[%c5_i32, %c0_i32_42] : memref<8x512xf32, #tpu.memory_space<vmem>> -> memref<1x512xf32, #tpu.memory_space<vmem>>
    %74 = tpu.memref_squeeze %73 : memref<1x512xf32, #tpu.memory_space<vmem>> -> memref<512xf32, #tpu.memory_space<vmem>>
    %75 = tpu.memref_slice %arg14[%c0_i32_40] : memref<2x!tpu.dma_semaphore, #tpu.memory_space<semaphore_mem>> -> memref<1x!tpu.dma_semaphore, #tpu.memory_space<semaphore_mem>>
    %76 = tpu.memref_squeeze %75 : memref<1x!tpu.dma_semaphore, #tpu.memory_space<semaphore_mem>> -> memref<!tpu.dma_semaphore, #tpu.memory_space<semaphore_mem>>
    tpu.enqueue_dma source(%72 : memref<512xf32, #tpu.memory_space<any>>) target(%74 : memref<512xf32, #tpu.memory_space<vmem>>) target_semaphore(%76 : memref<!tpu.dma_semaphore, #tpu.memory_space<semaphore_mem>>)
    %c5_43 = arith.constant 5 : index
    %77 = memref.load %arg1[%c5_43] : memref<8xi32, #tpu.memory_space<smem>>
    %c5_i32_44 = arith.constant 5 : i32
    %c1_i32_45 = arith.constant 1 : i32
    %c0_i32_46 = arith.constant 0 : i32
    %78 = tpu.memref_slice %arg3[%77, %c0_i32_46] : memref<512x512xf32, #tpu.memory_space<any>> -> memref<1x512xf32, #tpu.memory_space<any>>
    %79 = tpu.memref_squeeze %78 : memref<1x512xf32, #tpu.memory_space<any>> -> memref<512xf32, #tpu.memory_space<any>>
    %c0_i32_47 = arith.constant 0 : i32
    %80 = tpu.memref_slice %arg13[%c5_i32_44, %c0_i32_47] : memref<8x512xf32, #tpu.memory_space<vmem>> -> memref<1x512xf32, #tpu.memory_space<vmem>>
    %81 = tpu.memref_squeeze %80 : memref<1x512xf32, #tpu.memory_space<vmem>> -> memref<512xf32, #tpu.memory_space<vmem>>
    %82 = tpu.memref_slice %arg14[%c1_i32_45] : memref<2x!tpu.dma_semaphore, #tpu.memory_space<semaphore_mem>> -> memref<1x!tpu.dma_semaphore, #tpu.memory_space<semaphore_mem>>
    %83 = tpu.memref_squeeze %82 : memref<1x!tpu.dma_semaphore, #tpu.memory_space<semaphore_mem>> -> memref<!tpu.dma_semaphore, #tpu.memory_space<semaphore_mem>>
    tpu.enqueue_dma source(%79 : memref<512xf32, #tpu.memory_space<any>>) target(%81 : memref<512xf32, #tpu.memory_space<vmem>>) target_semaphore(%83 : memref<!tpu.dma_semaphore, #tpu.memory_space<semaphore_mem>>)
    %c6 = arith.constant 6 : index
    %84 = memref.load %arg0[%c6] : memref<8xi32, #tpu.memory_space<smem>>
    %c6_i32 = arith.constant 6 : i32
    %c0_i32_48 = arith.constant 0 : i32
    %c0_i32_49 = arith.constant 0 : i32
    %85 = tpu.memref_slice %arg2[%84, %c0_i32_49] : memref<512x512xf32, #tpu.memory_space<any>> -> memref<1x512xf32, #tpu.memory_space<any>>
    %86 = tpu.memref_squeeze %85 : memref<1x512xf32, #tpu.memory_space<any>> -> memref<512xf32, #tpu.memory_space<any>>
    %c0_i32_50 = arith.constant 0 : i32
    %87 = tpu.memref_slice %arg12[%c6_i32, %c0_i32_50] : memref<8x512xf32, #tpu.memory_space<vmem>> -> memref<1x512xf32, #tpu.memory_space<vmem>>
    %88 = tpu.memref_squeeze %87 : memref<1x512xf32, #tpu.memory_space<vmem>> -> memref<512xf32, #tpu.memory_space<vmem>>
    %89 = tpu.memref_slice %arg14[%c0_i32_48] : memref<2x!tpu.dma_semaphore, #tpu.memory_space<semaphore_mem>> -> memref<1x!tpu.dma_semaphore, #tpu.memory_space<semaphore_mem>>
    %90 = tpu.memref_squeeze %89 : memref<1x!tpu.dma_semaphore, #tpu.memory_space<semaphore_mem>> -> memref<!tpu.dma_semaphore, #tpu.memory_space<semaphore_mem>>
    tpu.enqueue_dma source(%86 : memref<512xf32, #tpu.memory_space<any>>) target(%88 : memref<512xf32, #tpu.memory_space<vmem>>) target_semaphore(%90 : memref<!tpu.dma_semaphore, #tpu.memory_space<semaphore_mem>>)
    %c6_51 = arith.constant 6 : index
    %91 = memref.load %arg1[%c6_51] : memref<8xi32, #tpu.memory_space<smem>>
    %c6_i32_52 = arith.constant 6 : i32
    %c1_i32_53 = arith.constant 1 : i32
    %c0_i32_54 = arith.constant 0 : i32
    %92 = tpu.memref_slice %arg3[%91, %c0_i32_54] : memref<512x512xf32, #tpu.memory_space<any>> -> memref<1x512xf32, #tpu.memory_space<any>>
    %93 = tpu.memref_squeeze %92 : memref<1x512xf32, #tpu.memory_space<any>> -> memref<512xf32, #tpu.memory_space<any>>
    %c0_i32_55 = arith.constant 0 : i32
    %94 = tpu.memref_slice %arg13[%c6_i32_52, %c0_i32_55] : memref<8x512xf32, #tpu.memory_space<vmem>> -> memref<1x512xf32, #tpu.memory_space<vmem>>
    %95 = tpu.memref_squeeze %94 : memref<1x512xf32, #tpu.memory_space<vmem>> -> memref<512xf32, #tpu.memory_space<vmem>>
    %96 = tpu.memref_slice %arg14[%c1_i32_53] : memref<2x!tpu.dma_semaphore, #tpu.memory_space<semaphore_mem>> -> memref<1x!tpu.dma_semaphore, #tpu.memory_space<semaphore_mem>>
    %97 = tpu.memref_squeeze %96 : memref<1x!tpu.dma_semaphore, #tpu.memory_space<semaphore_mem>> -> memref<!tpu.dma_semaphore, #tpu.memory_space<semaphore_mem>>
    tpu.enqueue_dma source(%93 : memref<512xf32, #tpu.memory_space<any>>) target(%95 : memref<512xf32, #tpu.memory_space<vmem>>) target_semaphore(%97 : memref<!tpu.dma_semaphore, #tpu.memory_space<semaphore_mem>>)
    %c7 = arith.constant 7 : index
    %98 = memref.load %arg0[%c7] : memref<8xi32, #tpu.memory_space<smem>>
    %c7_i32 = arith.constant 7 : i32
    %c0_i32_56 = arith.constant 0 : i32
    %c0_i32_57 = arith.constant 0 : i32
    %99 = tpu.memref_slice %arg2[%98, %c0_i32_57] : memref<512x512xf32, #tpu.memory_space<any>> -> memref<1x512xf32, #tpu.memory_space<any>>
    %100 = tpu.memref_squeeze %99 : memref<1x512xf32, #tpu.memory_space<any>> -> memref<512xf32, #tpu.memory_space<any>>
    %c0_i32_58 = arith.constant 0 : i32
    %101 = tpu.memref_slice %arg12[%c7_i32, %c0_i32_58] : memref<8x512xf32, #tpu.memory_space<vmem>> -> memref<1x512xf32, #tpu.memory_space<vmem>>
    %102 = tpu.memref_squeeze %101 : memref<1x512xf32, #tpu.memory_space<vmem>> -> memref<512xf32, #tpu.memory_space<vmem>>
    %103 = tpu.memref_slice %arg14[%c0_i32_56] : memref<2x!tpu.dma_semaphore, #tpu.memory_space<semaphore_mem>> -> memref<1x!tpu.dma_semaphore, #tpu.memory_space<semaphore_mem>>
    %104 = tpu.memref_squeeze %103 : memref<1x!tpu.dma_semaphore, #tpu.memory_space<semaphore_mem>> -> memref<!tpu.dma_semaphore, #tpu.memory_space<semaphore_mem>>
    tpu.enqueue_dma source(%100 : memref<512xf32, #tpu.memory_space<any>>) target(%102 : memref<512xf32, #tpu.memory_space<vmem>>) target_semaphore(%104 : memref<!tpu.dma_semaphore, #tpu.memory_space<semaphore_mem>>)
    %c7_59 = arith.constant 7 : index
    %105 = memref.load %arg1[%c7_59] : memref<8xi32, #tpu.memory_space<smem>>
    %c7_i32_60 = arith.constant 7 : i32
    %c1_i32_61 = arith.constant 1 : i32
    %c0_i32_62 = arith.constant 0 : i32
    %106 = tpu.memref_slice %arg3[%105, %c0_i32_62] : memref<512x512xf32, #tpu.memory_space<any>> -> memref<1x512xf32, #tpu.memory_space<any>>
    %107 = tpu.memref_squeeze %106 : memref<1x512xf32, #tpu.memory_space<any>> -> memref<512xf32, #tpu.memory_space<any>>
    %c0_i32_63 = arith.constant 0 : i32
    %108 = tpu.memref_slice %arg13[%c7_i32_60, %c0_i32_63] : memref<8x512xf32, #tpu.memory_space<vmem>> -> memref<1x512xf32, #tpu.memory_space<vmem>>
    %109 = tpu.memref_squeeze %108 : memref<1x512xf32, #tpu.memory_space<vmem>> -> memref<512xf32, #tpu.memory_space<vmem>>
    %110 = tpu.memref_slice %arg14[%c1_i32_61] : memref<2x!tpu.dma_semaphore, #tpu.memory_space<semaphore_mem>> -> memref<1x!tpu.dma_semaphore, #tpu.memory_space<semaphore_mem>>
    %111 = tpu.memref_squeeze %110 : memref<1x!tpu.dma_semaphore, #tpu.memory_space<semaphore_mem>> -> memref<!tpu.dma_semaphore, #tpu.memory_space<semaphore_mem>>
    tpu.enqueue_dma source(%107 : memref<512xf32, #tpu.memory_space<any>>) target(%109 : memref<512xf32, #tpu.memory_space<vmem>>) target_semaphore(%111 : memref<!tpu.dma_semaphore, #tpu.memory_space<semaphore_mem>>)
    %c0_64 = arith.constant 0 : index
    %c0_65 = arith.constant 0 : index
    %112 = vector.load %arg7[%c0_64, %c0_65] : memref<8x128xf32, #tpu.memory_space<vmem>>, vector<8x128xf32>
    %113 = arith.truncf %112 : vector<8x128xf32> to vector<8x128xbf16>
    %c0_66 = arith.constant 0 : index
    %c0_67 = arith.constant 0 : index
    %114 = vector.load %arg4[%c0_66, %c0_67] : memref<128x512xbf16, #tpu.memory_space<vmem>>, vector<128x512xbf16>
    %cst = arith.constant dense<0.000000e+00> : vector<8x512xf32>
    %115 = tpu.matmul %113, %114, %cst {dimension_numbers = #tpu.dot_dimension_numbers<[1], [0], [0], [1], [0, 0, 1, 1], [], []>} : vector<8x128xbf16>, vector<128x512xbf16>, vector<8x512xf32> -> vector<8x512xf32>
    %c0_i32_68 = arith.constant 0 : i32
    %c0_i32_69 = arith.constant 0 : i32
    %c0_i32_70 = arith.constant 0 : i32
    %116 = tpu.memref_slice %arg2[%c0_i32_69, %c0_i32_70] : memref<512x512xf32, #tpu.memory_space<any>> -> memref<8x512xf32, #tpu.memory_space<any>>
    %117 = tpu.memref_slice %arg14[%c0_i32_68] : memref<2x!tpu.dma_semaphore, #tpu.memory_space<semaphore_mem>> -> memref<1x!tpu.dma_semaphore, #tpu.memory_space<semaphore_mem>>
    %118 = tpu.memref_squeeze %117 : memref<1x!tpu.dma_semaphore, #tpu.memory_space<semaphore_mem>> -> memref<!tpu.dma_semaphore, #tpu.memory_space<semaphore_mem>>
    tpu.wait_dma2 semaphore(%118 : memref<!tpu.dma_semaphore, #tpu.memory_space<semaphore_mem>>) src(%116 : memref<8x512xf32, #tpu.memory_space<any>>) dst(%arg12 : memref<8x512xf32, #tpu.memory_space<vmem>>)
    %c1_i32_71 = arith.constant 1 : i32
    %c0_i32_72 = arith.constant 0 : i32
    %c0_i32_73 = arith.constant 0 : i32
    %119 = tpu.memref_slice %arg3[%c0_i32_72, %c0_i32_73] : memref<512x512xf32, #tpu.memory_space<any>> -> memref<8x512xf32, #tpu.memory_space<any>>
    %120 = tpu.memref_slice %arg14[%c1_i32_71] : memref<2x!tpu.dma_semaphore, #tpu.memory_space<semaphore_mem>> -> memref<1x!tpu.dma_semaphore, #tpu.memory_space<semaphore_mem>>
    %121 = tpu.memref_squeeze %120 : memref<1x!tpu.dma_semaphore, #tpu.memory_space<semaphore_mem>> -> memref<!tpu.dma_semaphore, #tpu.memory_space<semaphore_mem>>
    tpu.wait_dma2 semaphore(%121 : memref<!tpu.dma_semaphore, #tpu.memory_space<semaphore_mem>>) src(%119 : memref<8x512xf32, #tpu.memory_space<any>>) dst(%arg13 : memref<8x512xf32, #tpu.memory_space<vmem>>)
    %c0_74 = arith.constant 0 : index
    %c0_75 = arith.constant 0 : index
    %122 = vector.load %arg12[%c0_74, %c0_75] : memref<8x512xf32, #tpu.memory_space<vmem>>, vector<8x512xf32>
    %c0_76 = arith.constant 0 : index
    %c0_77 = arith.constant 0 : index
    %123 = vector.load %arg13[%c0_76, %c0_77] : memref<8x512xf32, #tpu.memory_space<vmem>>, vector<8x512xf32>
    %124 = arith.addf %122, %123 : vector<8x512xf32>
    %125 = arith.addf %124, %115 : vector<8x512xf32>
    %126 = vector.extract_strided_slice %125 {offsets = [0, 0], sizes = [8, 384], strides = [1, 1]} : vector<8x512xf32> to vector<8x384xf32>
    %127 = arith.negf %126 : vector<8x384xf32>
    %128 = math.exp %127 : vector<8x384xf32>
    %cst_78 = arith.constant 1.000000e+00 : f32
    %129 = vector.broadcast %cst_78 : f32 to vector<8x384xf32>
    %130 = arith.addf %129, %128 : vector<8x384xf32>
    %131 = arith.divf %129, %130 : vector<8x384xf32>
    %132 = vector.extract_strided_slice %125 {offsets = [0, 384], sizes = [8, 128], strides = [1, 1]} : vector<8x512xf32> to vector<8x128xf32>
    %133 = math.tanh %132 : vector<8x128xf32>
    %134 = vector.extract_strided_slice %131 {offsets = [0, 0], sizes = [8, 128], strides = [1, 1]} : vector<8x384xf32> to vector<8x128xf32>
    %135 = vector.extract_strided_slice %131 {offsets = [0, 128], sizes = [8, 128], strides = [1, 1]} : vector<8x384xf32> to vector<8x128xf32>
    %136 = vector.extract_strided_slice %131 {offsets = [0, 256], sizes = [8, 128], strides = [1, 1]} : vector<8x384xf32> to vector<8x128xf32>
    %c0_79 = arith.constant 0 : index
    %c0_80 = arith.constant 0 : index
    %137 = vector.load %arg8[%c0_79, %c0_80] : memref<8x128xf32, #tpu.memory_space<vmem>>, vector<8x128xf32>
    %138 = arith.mulf %135, %137 : vector<8x128xf32>
    %139 = arith.mulf %134, %133 : vector<8x128xf32>
    %140 = arith.addf %138, %139 : vector<8x128xf32>
    %141 = math.tanh %140 : vector<8x128xf32>
    %142 = arith.mulf %136, %141 : vector<8x128xf32>
    %c0_81 = arith.constant 0 : index
    %c0_82 = arith.constant 0 : index
    %143 = vector.load %arg10[%c0_81, %c0_82] : memref<8x128xf32, #tpu.memory_space<vmem>>, vector<8x128xf32>
    tpu.vector_store %arg10[%c0_81, %c0_82], %142 {strides = array<i32>} : memref<8x128xf32, #tpu.memory_space<vmem>>, vector<8x128xf32>,
    %c0_83 = arith.constant 0 : index
    %c0_84 = arith.constant 0 : index
    %144 = vector.load %arg11[%c0_83, %c0_84] : memref<8x128xf32, #tpu.memory_space<vmem>>, vector<8x128xf32>
    tpu.vector_store %arg11[%c0_83, %c0_84], %140 {strides = array<i32>} : memref<8x128xf32, #tpu.memory_space<vmem>>, vector<8x128xf32>,
    %145 = arith.truncf %142 : vector<8x128xf32> to vector<8x128xbf16>
    %c0_85 = arith.constant 0 : index
    %c0_86 = arith.constant 0 : index
    %146 = vector.load %arg5[%c0_85, %c0_86] : memref<128x512xbf16, #tpu.memory_space<vmem>>, vector<128x512xbf16>
    %cst_87 = arith.constant dense<0.000000e+00> : vector<8x512xf32>
    %147 = tpu.matmul %145, %146, %cst_87 {dimension_numbers = #tpu.dot_dimension_numbers<[1], [0], [0], [1], [0, 0, 1, 1], [], []>} : vector<8x128xbf16>, vector<128x512xbf16>, vector<8x512xf32> -> vector<8x512xf32>
    %c0_88 = arith.constant 0 : index
    %c0_89 = arith.constant 0 : index
    %148 = vector.load %arg6[%c0_88, %c0_89] : memref<1x512xf32, #tpu.memory_space<vmem>>, vector<1x512xf32>
    %149 = vector.broadcast %148 : vector<1x512xf32> to vector<8x512xf32>
    %150 = arith.addf %147, %149 : vector<8x512xf32>
    %c0_90 = arith.constant 0 : index
    %c0_91 = arith.constant 0 : index
    %151 = vector.load %arg9[%c0_90, %c0_91] : memref<8x512xf32, #tpu.memory_space<vmem>>, vector<8x512xf32>
    tpu.vector_store %arg9[%c0_90, %c0_91], %150 {strides = array<i32>} : memref<8x512xf32, #tpu.memory_space<vmem>>, vector<8x512xf32>,
    return
  }
}

</mosaic_0001>

<llo_original>
// kernel: decoder_forward.1
$region0: #{decoder_forward.1}
  #allocation0 [shape = 'u32[]', space=smem, size = 0x4, offset = 0x4, fixed_abs, tag = 'smem constant byte address 0x4 - core index']
  #allocation1 [shape = 'u32[144,128]{1,0:T(1,128)}', space=vmem, size = 0x12000, scoped, tag = 'internal scratch']
  #allocation2 [shape = 'f32[8,512]{1,0:T(8,128)}', space=vmem, size = 0x4000, scoped, tag = 'scratch operand']
  #allocation3 [shape = 'f32[8,512]{1,0:T(8,128)}', space=vmem, size = 0x4000, scoped, tag = 'scratch operand']
  #allocation4 [shape = 's32[2]{0}', space=sflag, size = 0x8, scoped, tag = 'scratch operand']
  #allocation21 [shape = 's32[]', space=sflag, size = 0x4, offset = 0, fixed_abs, tag = 'sflag constant byte address 0x0 - dummy sync flag']
  #allocation22 [shape = 's32[]', space=sflag, size = 0x4, offset = 0, fixed_abs, tag = 'sflag constant byte address 0x0 - dummy sync flag']
  #allocation23 [shape = 's32[]', space=sflag, size = 0x4, offset = 0, fixed_abs, tag = 'sflag constant byte address 0x0 - dummy sync flag']
  #allocation24 [shape = 's32[]', space=sflag, size = 0x4, offset = 0, fixed_abs, tag = 'sflag constant byte address 0x0 - dummy sync flag']
  #allocation25 [shape = 's32[]', space=sflag, size = 0x4, offset = 0, fixed_abs, tag = 'sflag constant byte address 0x0 - dummy sync flag']
  #allocation26 [shape = 's32[]', space=sflag, size = 0x4, offset = 0, fixed_abs, tag = 'sflag constant byte address 0x0 - dummy sync flag']
  #allocation27 [shape = 's32[]', space=sflag, size = 0x4, offset = 0, fixed_abs, tag = 'sflag constant byte address 0x0 - dummy sync flag']
  #allocation28 [shape = 's32[]', space=sflag, size = 0x4, offset = 0, fixed_abs, tag = 'sflag constant byte address 0x0 - dummy sync flag']
  #allocation29 [shape = 's32[]', space=sflag, size = 0x4, offset = 0, fixed_abs, tag = 'sflag constant byte address 0x0 - dummy sync flag']
  #allocation30 [shape = 's32[]', space=sflag, size = 0x4, offset = 0, fixed_abs, tag = 'sflag constant byte address 0x0 - dummy sync flag']
  #allocation31 [shape = 's32[]', space=sflag, size = 0x4, offset = 0, fixed_abs, tag = 'sflag constant byte address 0x0 - dummy sync flag']
  #allocation32 [shape = 's32[]', space=sflag, size = 0x4, offset = 0, fixed_abs, tag = 'sflag constant byte address 0x0 - dummy sync flag']
  #allocation33 [shape = 's32[]', space=sflag, size = 0x4, offset = 0, fixed_abs, tag = 'sflag constant byte address 0x0 - dummy sync flag']
  #allocation34 [shape = 's32[]', space=sflag, size = 0x4, offset = 0, fixed_abs, tag = 'sflag constant byte address 0x0 - dummy sync flag']
  #allocation35 [shape = 's32[]', space=sflag, size = 0x4, offset = 0, fixed_abs, tag = 'sflag constant byte address 0x0 - dummy sync flag']
  #allocation36 [shape = 's32[]', space=sflag, size = 0x4, offset = 0, fixed_abs, tag = 'sflag constant byte address 0x0 - dummy sync flag']
  %s0 = inlined_call_operand.vmem [shape: s32[8], index: 0, kind: input, shape index: {}]
  %s1 = inlined_call_operand.vmem [shape: s32[8], index: 1, kind: input, shape index: {}]
  %s2 = inlined_call_operand.hbm [shape: f32[512,512], index: 2, kind: input, shape index: {}]
  %s3 = inlined_call_operand.hbm [shape: f32[512,512], index: 3, kind: input, shape index: {}]
  %s4 = inlined_call_operand.hbm [shape: bf16[128,512], index: 4, kind: input, shape index: {}]
  %s5 = inlined_call_operand.hbm [shape: bf16[128,512], index: 5, kind: input, shape index: {}]
  %s6 = inlined_call_operand.vmem [shape: f32[1,512], index: 6, kind: input, shape index: {}]
  %s7 = inlined_call_operand.hbm [shape: f32[8,128], index: 7, kind: input, shape index: {}, may-alias: {7,10}]
  %s8 = inlined_call_operand.hbm [shape: f32[8,128], index: 8, kind: input, shape index: {}, may-alias: {8,11}]
  %s9 = inlined_call_operand.hbm [shape: f32[8,512], index: 9, kind: output, shape index: {0}]
  %s10 = inlined_call_operand.hbm [shape: f32[8,128], index: 10, kind: output, shape index: {1}, may-alias: {7,10}]
  %s11 = inlined_call_operand.hbm [shape: f32[8,128], index: 11, kind: output, shape index: {2}, may-alias: {8,11}]
  %12 = xla_tuple %s9, %s10, %s11
  %s13 = sld [smem:[#allocation0]]
  $region78: #{decoder_forward.1} parent=0
    _
  %s15 = ssub.s32 1, %s13
  %s16 = scalar_select 0, %s15, %s13
  $region1: #{decoder_forward.1} parent=0
    #allocation5 [shape = 'u8[512]{0}', space=smem, size = 0x200, scoped, tag = 'input window, operand 0, single buffered']
    #allocation6 [shape = 's32[1]{0}', space=sflag, size = 0x4, scoped, tag = 'scoped memory for decoder_forward.1']
    #allocation7 [shape = 's32[1]{0}', space=sflag, size = 0x4, scoped, tag = 'scoped memory for decoder_forward.1']
    #allocation8 [shape = 's32[1]{0}', space=sflag, size = 0x4, scoped, tag = 'scoped memory for decoder_forward.1']
    #allocation9 [shape = 'u8[512]{0}', space=smem, size = 0x200, scoped, tag = 'input window, operand 1, single buffered']
    #allocation10 [shape = 's32[1]{0}', space=sflag, size = 0x4, scoped, tag = 'scoped memory for decoder_forward.1']
    #allocation11 [shape = 'u8[131072]{0}', space=vmem, size = 0x20000, scoped, tag = 'input window, operand 4, single buffered']
    #allocation12 [shape = 'u8[131072]{0}', space=vmem, size = 0x20000, scoped, tag = 'input window, operand 5, single buffered']
    #allocation13 [shape = 's32[1]{0}', space=sflag, size = 0x4, scoped, tag = 'scoped memory for decoder_forward.1']
    #allocation14 [shape = 'u8[4096]{0}', space=vmem, size = 0x1000, scoped, tag = 'input window, operand 7, single buffered']
    #allocation15 [shape = 'u8[4096]{0}', space=vmem, size = 0x1000, scoped, tag = 'input window, operand 8, single buffered']
    #allocation16 [shape = 's32[1]{0}', space=sflag, size = 0x4, scoped, tag = 'scoped memory for decoder_forward.1']
    #allocation17 [shape = 'u8[16384]{0}', space=vmem, size = 0x4000, scoped, tag = 'output window, operand 0, single buffered']
    #allocation18 [shape = 'u8[4096]{0}', space=vmem, size = 0x1000, scoped, tag = 'output window, operand 1, single buffered']
    #allocation19 [shape = 's32[1]{0}', space=sflag, size = 0x4, scoped, tag = 'scoped memory for decoder_forward.1']
    #allocation20 [shape = 'u8[4096]{0}', space=vmem, size = 0x1000, scoped, tag = 'output window, operand 2, single buffered']
    %17 = vsyncpa [#allocation8], 0
    %18 = vsyncpa [#allocation10], 0
    %19 = vsyncpa [#allocation6], 0
    %20 = vsyncpa [#allocation13], 0
    %21 = vsyncpa [#allocation16], 0
    %22 = vsyncpa [#allocation7], 0
    %23 = vsyncpa [#allocation19], 0
    // Predicated region
    $region2: #{decoder_forward.1} parent=1 // pred_check
      _
    $region3: #{decoder_forward.1} parent=1 // pred_check_branch
      %25 = sbr.rel (0) target = $region5
    $region4: #{decoder_forward.1} parent=1 // pred_region
      %s27 = ssub.s32 16, 16
      %28 = vsyncadd [#allocation8], %s27
      %s30 = sshll.u32 %s0, 4
      %s31 = int_to_ptr.vmem [resolvable:$true] %s30
      %33 = dma.vmem_to_smem %s31, 16, [#allocation5], [#allocation8]
    $region5: #{decoder_forward.1} parent=1 // pred_fallthru
      _
    // Predicated region
    $region6: #{decoder_forward.1} parent=1 // pred_check
      _
    $region7: #{decoder_forward.1} parent=1 // pred_check_branch
      %35 = sbr.rel (0) target = $region9
    $region8: #{decoder_forward.1} parent=1 // pred_region
      %s37 = ssub.s32 16, 16
      %38 = vsyncadd [#allocation10], %s37
      %s40 = sshll.u32 %s1, 4
      %s41 = int_to_ptr.vmem [resolvable:$true] %s40
      %43 = dma.vmem_to_smem %s41, 16, [#allocation9], [#allocation10]
    $region9: #{decoder_forward.1} parent=1 // pred_fallthru
      _
    // Predicated region
    $region10: #{decoder_forward.1} parent=1 // pred_check
      _
    $region11: #{decoder_forward.1} parent=1 // pred_check_branch
      %45 = sbr.rel (0) target = $region13
    $region12: #{decoder_forward.1} parent=1 // pred_region
      %s47 = ssub.s32 4096, 4096
      %48 = vsyncadd [#allocation6], %s47
      %s49 = sshll.u32 [#allocation11], 4
      %s50 = int_to_ptr.vmem [resolvable:$true] %s49
      %55 = dma.hbm_to_vmem [thread:$0]  %s4, 4096, %s50, [#allocation6], 256, 256, 16
    $region13: #{decoder_forward.1} parent=1 // pred_fallthru
      _
    // Predicated region
    $region14: #{decoder_forward.1} parent=1 // pred_check
      _
    $region15: #{decoder_forward.1} parent=1 // pred_check_branch
      %57 = sbr.rel (0) target = $region17
    $region16: #{decoder_forward.1} parent=1 // pred_region
      %s59 = ssub.s32 4096, 4096
      %60 = vsyncadd [#allocation13], %s59
      %s61 = sshll.u32 [#allocation12], 4
      %s62 = int_to_ptr.vmem [resolvable:$true] %s61
      %67 = dma.hbm_to_vmem [thread:$0]  %s5, 4096, %s62, [#allocation13], 256, 256, 16
    $region17: #{decoder_forward.1} parent=1 // pred_fallthru
      _
    // Predicated region
    $region18: #{decoder_forward.1} parent=1 // pred_check
      _
    $region19: #{decoder_forward.1} parent=1 // pred_check_branch
      %69 = sbr.rel (0) target = $region21
    $region20: #{decoder_forward.1} parent=1 // pred_region
      _
    $region21: #{decoder_forward.1} parent=1 // pred_fallthru
      _
    // Predicated region
    $region22: #{decoder_forward.1} parent=1 // pred_check
      _
    $region23: #{decoder_forward.1} parent=1 // pred_check_branch
      %71 = sbr.rel (0) target = $region25
    $region24: #{decoder_forward.1} parent=1 // pred_region
      %s73 = ssub.s32 128, 128
      %74 = vsyncadd [#allocation13], %s73
      %s76 = sshll.u32 [#allocation14], 4
      %s77 = int_to_ptr.vmem [resolvable:$true] %s76
      %79 = dma.hbm_to_vmem [thread:$0]  %s7, 128, %s77, [#allocation13]
    $region25: #{decoder_forward.1} parent=1 // pred_fallthru
      _
    // Predicated region
    $region26: #{decoder_forward.1} parent=1 // pred_check
      _
    $region27: #{decoder_forward.1} parent=1 // pred_check_branch
      %81 = sbr.rel (0) target = $region29
    $region28: #{decoder_forward.1} parent=1 // pred_region
      %s83 = ssub.s32 128, 128
      %84 = vsyncadd [#allocation16], %s83
      %s86 = sshll.u32 [#allocation15], 4
      %s87 = int_to_ptr.vmem [resolvable:$true] %s86
      %89 = dma.hbm_to_vmem [thread:$0]  %s8, 128, %s87, [#allocation16]
    $region29: #{decoder_forward.1} parent=1 // pred_fallthru
      _
    // Predicated region
    $region30: #{decoder_forward.1} parent=1 // pred_check
      _
    $region31: #{decoder_forward.1} parent=1 // pred_check_branch
      %91 = sbr.rel (0) target = $region33
    $region32: #{decoder_forward.1} parent=1 // pred_region
      %92 = dma.done [#allocation8], 16
    $region33: #{decoder_forward.1} parent=1 // pred_fallthru
      _
    // Predicated region
    $region34: #{decoder_forward.1} parent=1 // pred_check
      _
    $region35: #{decoder_forward.1} parent=1 // pred_check_branch
      %94 = sbr.rel (0) target = $region37
    $region36: #{decoder_forward.1} parent=1 // pred_region
      %95 = dma.done [#allocation10], 16
    $region37: #{decoder_forward.1} parent=1 // pred_fallthru
      _
    // Predicated region
    $region38: #{decoder_forward.1} parent=1 // pred_check
      _
    $region39: #{decoder_forward.1} parent=1 // pred_check_branch
      %97 = sbr.rel (0) target = $region41
    $region40: #{decoder_forward.1} parent=1 // pred_region
      %98 = dma.done [#allocation6], 4096
    $region41: #{decoder_forward.1} parent=1 // pred_fallthru
      _
    // Predicated region
    $region42: #{decoder_forward.1} parent=1 // pred_check
      _
    $region43: #{decoder_forward.1} parent=1 // pred_check_branch
      %100 = sbr.rel (0) target = $region45
    $region44: #{decoder_forward.1} parent=1 // pred_region
      %101 = dma.done [#allocation13], 4096
    $region45: #{decoder_forward.1} parent=1 // pred_fallthru
      _
    // Predicated region
    $region46: #{decoder_forward.1} parent=1 // pred_check
      _
    $region47: #{decoder_forward.1} parent=1 // pred_check_branch
      %103 = sbr.rel (0) target = $region49
    $region48: #{decoder_forward.1} parent=1 // pred_region
      %104 = dma.done [#allocation13], 128
    $region49: #{decoder_forward.1} parent=1 // pred_fallthru
      _
    // Predicated region
    $region50: #{decoder_forward.1} parent=1 // pred_check
      _
    $region51: #{decoder_forward.1} parent=1 // pred_check_branch
      %106 = sbr.rel (0) target = $region53
    $region52: #{decoder_forward.1} parent=1 // pred_region
      %107 = dma.done [#allocation16], 128
    $region53: #{decoder_forward.1} parent=1 // pred_fallthru
      _
    %108 = sfence
    %s110 = sld [smem:[#allocation5]]
    %s111 = sshrl.u32 %s110, 3
    %s112 = sand.u32 %s110, 7
    %s113 = smul.u32 %s111, 32
    %s114 = sadd.s32 %s112, %s113
    %s115 = smul.addr %s114, 16
    %s116 = scalar_lea.hbm %s2, %s115
    %s118 = sshll.u32 [#allocation2], 4
    %s119 = int_to_ptr.vmem [resolvable:$true] %s118
    %121 = dma.hbm_to_vmem [thread:$0]  %s116, 64, %s119, [#allocation4], 128, 128, 1
    %s122 = sld [smem:[#allocation9]]
    %s123 = sshrl.u32 %s122, 3
    %s124 = sand.u32 %s122, 7
    %s125 = smul.u32 %s123, 32
    %s126 = sadd.s32 %s124, %s125
    %s127 = smul.addr %s126, 16
    %s128 = scalar_lea.hbm %s3, %s127
    %s129 = scalar_lea.sflag [#allocation4], 1
    %s131 = sshll.u32 [#allocation3], 4
    %s132 = int_to_ptr.vmem [resolvable:$true] %s131
    %134 = dma.hbm_to_vmem [thread:$0]  %s128, 64, %s132, %s129, 128, 128, 1
    %s135 = sld [smem:[#allocation5 + $0x1]]
    %s136 = sshrl.u32 %s135, 3
    %s137 = sand.u32 %s135, 7
    %s138 = smul.u32 %s136, 32
    %s139 = sadd.s32 %s137, %s138
    %s140 = smul.addr %s139, 16
    %s141 = scalar_lea.hbm %s2, %s140
    %s142 = scalar_lea.vmem [#allocation2], 1
    %s144 = sshll.u32 %s142, 4
    %s145 = int_to_ptr.vmem [resolvable:$true] %s144
    %147 = dma.hbm_to_vmem [thread:$0]  %s141, 64, %s145, [#allocation4], 128, 128, 1
    %s148 = sld [smem:[#allocation9 + $0x1]]
    %s149 = sshrl.u32 %s148, 3
    %s150 = sand.u32 %s148, 7
    %s151 = smul.u32 %s149, 32
    %s152 = sadd.s32 %s150, %s151
    %s153 = smul.addr %s152, 16
    %s154 = scalar_lea.hbm %s3, %s153
    %s155 = scalar_lea.vmem [#allocation3], 1
    %s157 = sshll.u32 %s155, 4
    %s158 = int_to_ptr.vmem [resolvable:$true] %s157
    %160 = dma.hbm_to_vmem [thread:$0]  %s154, 64, %s158, %s129, 128, 128, 1
    %s161 = sld [smem:[#allocation5 + $0x2]]
    %s162 = sshrl.u32 %s161, 3
    %s163 = sand.u32 %s161, 7
    %s164 = smul.u32 %s162, 32
    %s165 = sadd.s32 %s163, %s164
    %s166 = smul.addr %s165, 16
    %s167 = scalar_lea.hbm %s2, %s166
    %s168 = scalar_lea.vmem [#allocation2], 2
    %s170 = sshll.u32 %s168, 4
    %s171 = int_to_ptr.vmem [resolvable:$true] %s170
    %173 = dma.hbm_to_vmem [thread:$0]  %s167, 64, %s171, [#allocation4], 128, 128, 1
    %s174 = sld [smem:[#allocation9 + $0x2]]
    %s175 = sshrl.u32 %s174, 3
    %s176 = sand.u32 %s174, 7
    %s177 = smul.u32 %s175, 32
    %s178 = sadd.s32 %s176, %s177
    %s179 = smul.addr %s178, 16
    %s180 = scalar_lea.hbm %s3, %s179
    %s181 = scalar_lea.vmem [#allocation3], 2
    %s183 = sshll.u32 %s181, 4
    %s184 = int_to_ptr.vmem [resolvable:$true] %s183
    %186 = dma.hbm_to_vmem [thread:$0]  %s180, 64, %s184, %s129, 128, 128, 1
    %s187 = sld [smem:[#allocation5 + $0x3]]
    %s188 = sshrl.u32 %s187, 3
    %s189 = sand.u32 %s187, 7
    %s190 = smul.u32 %s188, 32
    %s191 = sadd.s32 %s189, %s190
    %s192 = smul.addr %s191, 16
    %s193 = scalar_lea.hbm %s2, %s192
    %s194 = scalar_lea.vmem [#allocation2], 3
    %s196 = sshll.u32 %s194, 4
    %s197 = int_to_ptr.vmem [resolvable:$true] %s196
    %199 = dma.hbm_to_vmem [thread:$0]  %s193, 64, %s197, [#allocation4], 128, 128, 1
    %s200 = sld [smem:[#allocation9 + $0x3]]
    %s201 = sshrl.u32 %s200, 3
    %s202 = sand.u32 %s200, 7
    %s203 = smul.u32 %s201, 32
    %s204 = sadd.s32 %s202, %s203
    %s205 = smul.addr %s204, 16
    %s206 = scalar_lea.hbm %s3, %s205
    %s207 = scalar_lea.vmem [#allocation3], 3
    %s209 = sshll.u32 %s207, 4
    %s210 = int_to_ptr.vmem [resolvable:$true] %s209
    %212 = dma.hbm_to_vmem [thread:$0]  %s206, 64, %s210, %s129, 128, 128, 1
    %s213 = sld [smem:[#allocation5 + $0x4]]
    %s214 = sshrl.u32 %s213, 3
    %s215 = sand.u32 %s213, 7
    %s216 = smul.u32 %s214, 32
    %s217 = sadd.s32 %s215, %s216
    %s218 = smul.addr %s217, 16
    %s219 = scalar_lea.hbm %s2, %s218
    %s220 = scalar_lea.vmem [#allocation2], 4
    %s222 = sshll.u32 %s220, 4
    %s223 = int_to_ptr.vmem [resolvable:$true] %s222
    %225 = dma.hbm_to_vmem [thread:$0]  %s219, 64, %s223, [#allocation4], 128, 128, 1
    %s226 = sld [smem:[#allocation9 + $0x4]]
    %s227 = sshrl.u32 %s226, 3
    %s228 = sand.u32 %s226, 7
    %s229 = smul.u32 %s227, 32
    %s230 = sadd.s32 %s228, %s229
    %s231 = smul.addr %s230, 16
    %s232 = scalar_lea.hbm %s3, %s231
    %s233 = scalar_lea.vmem [#allocation3], 4
    %s235 = sshll.u32 %s233, 4
    %s236 = int_to_ptr.vmem [resolvable:$true] %s235
    %238 = dma.hbm_to_vmem [thread:$0]  %s232, 64, %s236, %s129, 128, 128, 1
    %s239 = sld [smem:[#allocation5 + $0x5]]
    %s240 = sshrl.u32 %s239, 3
    %s241 = sand.u32 %s239, 7
    %s242 = smul.u32 %s240, 32
    %s243 = sadd.s32 %s241, %s242
    %s244 = smul.addr %s243, 16
    %s245 = scalar_lea.hbm %s2, %s244
    %s246 = scalar_lea.vmem [#allocation2], 5
    %s248 = sshll.u32 %s246, 4
    %s249 = int_to_ptr.vmem [resolvable:$true] %s248
    %251 = dma.hbm_to_vmem [thread:$0]  %s245, 64, %s249, [#allocation4], 128, 128, 1
    %s252 = sld [smem:[#allocation9 + $0x5]]
    %s253 = sshrl.u32 %s252, 3
    %s254 = sand.u32 %s252, 7
    %s255 = smul.u32 %s253, 32
    %s256 = sadd.s32 %s254, %s255
    %s257 = smul.addr %s256, 16
    %s258 = scalar_lea.hbm %s3, %s257
    %s259 = scalar_lea.vmem [#allocation3], 5
    %s261 = sshll.u32 %s259, 4
    %s262 = int_to_ptr.vmem [resolvable:$true] %s261
    %264 = dma.hbm_to_vmem [thread:$0]  %s258, 64, %s262, %s129, 128, 128, 1
    %s265 = sld [smem:[#allocation5 + $0x6]]
    %s266 = sshrl.u32 %s265, 3
    %s267 = sand.u32 %s265, 7
    %s268 = smul.u32 %s266, 32
    %s269 = sadd.s32 %s267, %s268
    %s270 = smul.addr %s269, 16
    %s271 = scalar_lea.hbm %s2, %s270
    %s272 = scalar_lea.vmem [#allocation2], 6
    %s274 = sshll.u32 %s272, 4
    %s275 = int_to_ptr.vmem [resolvable:$true] %s274
    %277 = dma.hbm_to_vmem [thread:$0]  %s271, 64, %s275, [#allocation4], 128, 128, 1
    %s278 = sld [smem:[#allocation9 + $0x6]]
    %s279 = sshrl.u32 %s278, 3
    %s280 = sand.u32 %s278, 7
    %s281 = smul.u32 %s279, 32
    %s282 = sadd.s32 %s280, %s281
    %s283 = smul.addr %s282, 16
    %s284 = scalar_lea.hbm %s3, %s283
    %s285 = scalar_lea.vmem [#allocation3], 6
    %s287 = sshll.u32 %s285, 4
    %s288 = int_to_ptr.vmem [resolvable:$true] %s287
    %290 = dma.hbm_to_vmem [thread:$0]  %s284, 64, %s288, %s129, 128, 128, 1
    %s291 = sld [smem:[#allocation5 + $0x7]]
    %s292 = sshrl.u32 %s291, 3
    %s293 = sand.u32 %s291, 7
    %s294 = smul.u32 %s292, 32
    %s295 = sadd.s32 %s293, %s294
    %s296 = smul.addr %s295, 16
    %s297 = scalar_lea.hbm %s2, %s296
    %s298 = scalar_lea.vmem [#allocation2], 7
    %s300 = sshll.u32 %s298, 4
    %s301 = int_to_ptr.vmem [resolvable:$true] %s300
    %303 = dma.hbm_to_vmem [thread:$0]  %s297, 64, %s301, [#allocation4], 128, 128, 1
    %s304 = sld [smem:[#allocation9 + $0x7]]
    %s305 = sshrl.u32 %s304, 3
    %s306 = sand.u32 %s304, 7
    %s307 = smul.u32 %s305, 32
    %s308 = sadd.s32 %s306, %s307
    %s309 = smul.addr %s308, 16
    %s310 = scalar_lea.hbm %s3, %s309
    %s311 = scalar_lea.vmem [#allocation3], 7
    %s313 = sshll.u32 %s311, 4
    %s314 = int_to_ptr.vmem [resolvable:$true] %s313
    %316 = dma.hbm_to_vmem [thread:$0]  %s310, 64, %s314, %s129, 128, 128, 1
    %v317 = vld [vmem:[#allocation14] sm:$0xff]
    %v318 = vpack.c.bf16 %v317, %v317
    %v319 = vld [vmem:[#allocation11] sm:$0xff]
    %v320 = vld [vmem:[#allocation11 + $0x8] sm:$0xff]
    %v321 = vld [vmem:[#allocation11 + $0x10] sm:$0xff]
    %v322 = vld [vmem:[#allocation11 + $0x18] sm:$0xff]
    %v323 = vld [vmem:[#allocation11 + $0x20] sm:$0xff]
    %v324 = vld [vmem:[#allocation11 + $0x28] sm:$0xff]
    %v325 = vld [vmem:[#allocation11 + $0x30] sm:$0xff]
    %v326 = vld [vmem:[#allocation11 + $0x38] sm:$0xff]
    %v327 = vld [vmem:[#allocation11 + $0x40] sm:$0xff]
    %v328 = vld [vmem:[#allocation11 + $0x48] sm:$0xff]
    %v329 = vld [vmem:[#allocation11 + $0x50] sm:$0xff]
    %v330 = vld [vmem:[#allocation11 + $0x58] sm:$0xff]
    %v331 = vld [vmem:[#allocation11 + $0x60] sm:$0xff]
    %v332 = vld [vmem:[#allocation11 + $0x68] sm:$0xff]
    %v333 = vld [vmem:[#allocation11 + $0x70] sm:$0xff]
    %v334 = vld [vmem:[#allocation11 + $0x78] sm:$0xff]
    %v335 = vld [vmem:[#allocation11 + $0x80] sm:$0xff]
    %v336 = vld [vmem:[#allocation11 + $0x88] sm:$0xff]
    %v337 = vld [vmem:[#allocation11 + $0x90] sm:$0xff]
    %v338 = vld [vmem:[#allocation11 + $0x98] sm:$0xff]
    %v339 = vld [vmem:[#allocation11 + $0xa0] sm:$0xff]
    %v340 = vld [vmem:[#allocation11 + $0xa8] sm:$0xff]
    %v341 = vld [vmem:[#allocation11 + $0xb0] sm:$0xff]
    %v342 = vld [vmem:[#allocation11 + $0xb8] sm:$0xff]
    %v343 = vld [vmem:[#allocation11 + $0xc0] sm:$0xff]
    %v344 = vld [vmem:[#allocation11 + $0xc8] sm:$0xff]
    %v345 = vld [vmem:[#allocation11 + $0xd0] sm:$0xff]
    %v346 = vld [vmem:[#allocation11 + $0xd8] sm:$0xff]
    %v347 = vld [vmem:[#allocation11 + $0xe0] sm:$0xff]
    %v348 = vld [vmem:[#allocation11 + $0xe8] sm:$0xff]
    %v349 = vld [vmem:[#allocation11 + $0xf0] sm:$0xff]
    %v350 = vld [vmem:[#allocation11 + $0xf8] sm:$0xff]
    %v383 = vunpack.c.l.b16 %v319
    %v384 = vunpack.c.h.b16 %v319
    %v385 = vunpack.c.l.b16 %v320
    %v386 = vunpack.c.h.b16 %v320
    %v387 = vunpack.c.l.b16 %v321
    %v388 = vunpack.c.h.b16 %v321
    %v389 = vunpack.c.l.b16 %v322
    %v390 = vunpack.c.h.b16 %v322
    %v391 = vunpack.c.l.b16 %v323
    %v392 = vunpack.c.h.b16 %v323
    %v393 = vunpack.c.l.b16 %v324
    %v394 = vunpack.c.h.b16 %v324
    %v395 = vunpack.c.l.b16 %v325
    %v396 = vunpack.c.h.b16 %v325
    %v397 = vunpack.c.l.b16 %v326
    %v398 = vunpack.c.h.b16 %v326
    %v399 = vunpack.c.l.b16 %v327
    %v400 = vunpack.c.h.b16 %v327
    %v401 = vunpack.c.l.b16 %v328
    %v402 = vunpack.c.h.b16 %v328
    %v403 = vunpack.c.l.b16 %v329
    %v404 = vunpack.c.h.b16 %v329
    %v405 = vunpack.c.l.b16 %v330
    %v406 = vunpack.c.h.b16 %v330
    %v407 = vunpack.c.l.b16 %v331
    %v408 = vunpack.c.h.b16 %v331
    %v409 = vunpack.c.l.b16 %v332
    %v410 = vunpack.c.h.b16 %v332
    %v411 = vunpack.c.l.b16 %v333
    %v412 = vunpack.c.h.b16 %v333
    %v413 = vunpack.c.l.b16 %v334
    %v414 = vunpack.c.h.b16 %v334
    %v415 = vunpack.c.l.b16 %v335
    %v416 = vunpack.c.h.b16 %v335
    %v417 = vunpack.c.l.b16 %v336
    %v418 = vunpack.c.h.b16 %v336
    %v419 = vunpack.c.l.b16 %v337
    %v420 = vunpack.c.h.b16 %v337
    %v421 = vunpack.c.l.b16 %v338
    %v422 = vunpack.c.h.b16 %v338
    %v423 = vunpack.c.l.b16 %v339
    %v424 = vunpack.c.h.b16 %v339
    %v425 = vunpack.c.l.b16 %v340
    %v426 = vunpack.c.h.b16 %v340
    %v427 = vunpack.c.l.b16 %v341
    %v428 = vunpack.c.h.b16 %v341
    %v429 = vunpack.c.l.b16 %v342
    %v430 = vunpack.c.h.b16 %v342
    %v431 = vunpack.c.l.b16 %v343
    %v432 = vunpack.c.h.b16 %v343
    %v433 = vunpack.c.l.b16 %v344
    %v434 = vunpack.c.h.b16 %v344
    %v435 = vunpack.c.l.b16 %v345
    %v436 = vunpack.c.h.b16 %v345
    %v437 = vunpack.c.l.b16 %v346
    %v438 = vunpack.c.h.b16 %v346
    %v439 = vunpack.c.l.b16 %v347
    %v440 = vunpack.c.h.b16 %v347
    %v441 = vunpack.c.l.b16 %v348
    %v442 = vunpack.c.h.b16 %v348
    %v443 = vunpack.c.l.b16 %v349
    %v444 = vunpack.c.h.b16 %v349
    %v445 = vunpack.c.l.b16 %v350
    %v446 = vunpack.c.h.b16 %v350
    %v447 = vpack.c.b16 %v387, %v383
    %v448 = vpack.c.b16 %v388, %v384
    %v449 = vpack.c.b16 %v389, %v385
    %v450 = vpack.c.b16 %v390, %v386
    %v451 = vpack.c.b16 %v395, %v391
    %v452 = vpack.c.b16 %v396, %v392
    %v453 = vpack.c.b16 %v397, %v393
    %v454 = vpack.c.b16 %v398, %v394
    %v455 = vpack.c.b16 %v403, %v399
    %v456 = vpack.c.b16 %v404, %v400
    %v457 = vpack.c.b16 %v405, %v401
    %v458 = vpack.c.b16 %v406, %v402
    %v459 = vpack.c.b16 %v411, %v407
    %v460 = vpack.c.b16 %v412, %v408
    %v461 = vpack.c.b16 %v413, %v409
    %v462 = vpack.c.b16 %v414, %v410
    %v463 = vpack.c.b16 %v419, %v415
    %v464 = vpack.c.b16 %v420, %v416
    %v465 = vpack.c.b16 %v421, %v417
    %v466 = vpack.c.b16 %v422, %v418
    %v467 = vpack.c.b16 %v427, %v423
    %v468 = vpack.c.b16 %v428, %v424
    %v469 = vpack.c.b16 %v429, %v425
    %v470 = vpack.c.b16 %v430, %v426
    %v471 = vpack.c.b16 %v435, %v431
    %v472 = vpack.c.b16 %v436, %v432
    %v473 = vpack.c.b16 %v437, %v433
    %v474 = vpack.c.b16 %v438, %v434
    %v475 = vpack.c.b16 %v443, %v439
    %v476 = vpack.c.b16 %v444, %v440
    %v477 = vpack.c.b16 %v445, %v441
    %v478 = vpack.c.b16 %v446, %v442
    %511 = vmatprep.subr.bf16.mxu0 %v448
    %512 = vmatpush1.bf16.msra.mxu0 %v447
    %513 = vmatprep.subr.bf16.mxu0 %v452
    %514 = vmatpush1.bf16.msra.mxu0 %v451
    %515 = vmatprep.subr.bf16.mxu0 %v456
    %516 = vmatpush1.bf16.msra.mxu0 %v455
    %517 = vmatprep.subr.bf16.mxu0 %v460
    %518 = vmatpush1.bf16.msra.mxu0 %v459
    %519 = vmatprep.subr.bf16.mxu0 %v464
    %520 = vmatpush1.bf16.msra.mxu0 %v463
    %521 = vmatprep.subr.bf16.mxu0 %v468
    %522 = vmatpush1.bf16.msra.mxu0 %v467
    %523 = vmatprep.subr.bf16.mxu0 %v472
    %524 = vmatpush1.bf16.msra.mxu0 %v471
    %525 = vmatprep.subr.bf16.mxu0 %v476
    %526 = vmatpush1.bf16.msra.mxu0 %v475
    %527 = vmatprep.subr.bf16.mxu0 0
    %528 = vmatpush1.bf16.msra.mxu0 0
    %529 = vmatprep.subr.bf16.mxu0 0
    %530 = vmatpush1.bf16.msra.mxu0 0
    %531 = vmatprep.subr.bf16.mxu0 0
    %532 = vmatpush1.bf16.msra.mxu0 0
    %533 = vmatprep.subr.bf16.mxu0 0
    %534 = vmatpush1.bf16.msra.mxu0 0
    %535 = vmatprep.subr.bf16.mxu0 0
    %536 = vmatpush1.bf16.msra.mxu0 0
    %537 = vmatprep.subr.bf16.mxu0 0
    %538 = vmatpush1.bf16.msra.mxu0 0
    %539 = vmatprep.subr.bf16.mxu0 0
    %540 = vmatpush1.bf16.msra.mxu0 0
    %541 = vmatprep.subr.bf16.mxu0 0
    %542 = vmatpush1.bf16.msra.mxu0 0
    %543 = vmatprep.mubr.bf16.mxu0 0
    %544 = vmatmul.mubr.bf16.gmra.mrb[0].mxu0 %v318
    %v545 = vpop.f32.mrb[0].mxu0
    %v546 = vadd.f32 0.0, %v545
    %v547 = vpop.f32.mrb[0].mxu0
    %v548 = vadd.f32 0.0, %v547
    %v549 = vpop.f32.mrb[0].mxu0
    %v550 = vpop.f32.mrb[0].mxu0
    %551 = vdwg.mxu0
    %552 = vmatprep.subr.bf16.mxu0 %v450
    %553 = vmatpush1.bf16.msra.mxu0 %v449
    %554 = vmatprep.subr.bf16.mxu0 %v454
    %555 = vmatpush1.bf16.msra.mxu0 %v453
    %556 = vmatprep.subr.bf16.mxu0 %v458
    %557 = vmatpush1.bf16.msra.mxu0 %v457
    %558 = vmatprep.subr.bf16.mxu0 %v462
    %559 = vmatpush1.bf16.msra.mxu0 %v461
    %560 = vmatprep.subr.bf16.mxu0 %v466
    %561 = vmatpush1.bf16.msra.mxu0 %v465
    %562 = vmatprep.subr.bf16.mxu0 %v470
    %563 = vmatpush1.bf16.msra.mxu0 %v469
    %564 = vmatprep.subr.bf16.mxu0 %v474
    %565 = vmatpush1.bf16.msra.mxu0 %v473
    %566 = vmatprep.subr.bf16.mxu0 %v478
    %567 = vmatpush1.bf16.msra.mxu0 %v477
    %568 = vmatprep.subr.bf16.mxu0 0
    %569 = vmatpush1.bf16.msra.mxu0 0
    %570 = vmatprep.subr.bf16.mxu0 0
    %571 = vmatpush1.bf16.msra.mxu0 0
    %572 = vmatprep.subr.bf16.mxu0 0
    %573 = vmatpush1.bf16.msra.mxu0 0
    %574 = vmatprep.subr.bf16.mxu0 0
    %575 = vmatpush1.bf16.msra.mxu0 0
    %576 = vmatprep.subr.bf16.mxu0 0
    %577 = vmatpush1.bf16.msra.mxu0 0
    %578 = vmatprep.subr.bf16.mxu0 0
    %579 = vmatpush1.bf16.msra.mxu0 0
    %580 = vmatprep.subr.bf16.mxu0 0
    %581 = vmatpush1.bf16.msra.mxu0 0
    %582 = vmatprep.subr.bf16.mxu0 0
    %583 = vmatpush1.bf16.msra.mxu0 0
    %584 = vmatprep.mubr.bf16.mxu0 0
    %585 = vmatmul.mubr.bf16.gmra.mrb[0].mxu0 %v318
    %v586 = vpop.f32.mrb[0].mxu0
    %v587 = vadd.f32 0.0, %v586
    %v588 = vpop.f32.mrb[0].mxu0
    %v589 = vadd.f32 0.0, %v588
    %v590 = vpop.f32.mrb[0].mxu0
    %v591 = vpop.f32.mrb[0].mxu0
    %592 = vdwg.mxu0
    %s593 = smul.u32 8, 1
    %s594 = smul.u32 %s593, 4
    %s595 = sshll.u32 %s594, 4
    %596 = dma.done [#allocation4], %s595
    %s597 = sshll.u32 %s594, 4
    %598 = dma.done %s129, %s597
    %v599 = vld [vmem:[#allocation2] sm:$0xff]
    %v600 = vld [vmem:[#allocation2 + $0x8] sm:$0xff]
    %v601 = vld [vmem:[#allocation2 + $0x10] sm:$0xff]
    %v602 = vld [vmem:[#allocation2 + $0x18] sm:$0xff]
    %v603 = vld [vmem:[#allocation3] sm:$0xff]
    %v604 = vld [vmem:[#allocation3 + $0x8] sm:$0xff]
    %v605 = vld [vmem:[#allocation3 + $0x10] sm:$0xff]
    %v606 = vld [vmem:[#allocation3 + $0x18] sm:$0xff]
    %v607 = vadd.f32 %v599, %v603
    %v608 = vadd.f32 %v600, %v604
    %v609 = vadd.f32 %v601, %v605
    %v610 = vadd.f32 %v602, %v606
    %v611 = vadd.f32 %v607, %v546
    %v612 = vadd.f32 %v608, %v548
    %v613 = vadd.f32 %v609, %v587
    %v614 = vadd.f32 %v610, %v589
    %v615 = vxor.u32 %v611, 2147483648
    %v616 = vxor.u32 %v612, 2147483648
    %v617 = vxor.u32 %v613, 2147483648
    %v618 = vmul.f32 %v615, 1.442695
    %v619 = vpow.pop %v618
    %v620 = vmul.f32 %v616, 1.442695
    %v621 = vpow.pop %v620
    %v622 = vmul.f32 %v617, 1.442695
    %v623 = vpow.pop %v622
    %v624 = vadd.f32 %v619, 1.0
    %v625 = vadd.f32 %v621, 1.0
    %v626 = vadd.f32 %v623, 1.0
    %v627 = vrcp.pop %v624
    %v628 = vmul.f32 1.0, %v627
    %v629 = vrcp.pop %v625
    %v630 = vmul.f32 1.0, %v629
    %v631 = vrcp.pop %v626
    %v632 = vmul.f32 1.0, %v631
    %v633 = vtanh.pop %v614
    %v634 = vld [vmem:[#allocation15] sm:$0xff]
    %v635 = vmul.f32 %v630, %v634
    %v636 = vmul.f32 %v628, %v633
    %v637 = vadd.f32 %v635, %v636
    %v638 = vtanh.pop %v637
    %v639 = vmul.f32 %v632, %v638
    %640 = vst [vmem:[#allocation18] sm:$0xff] %v639
    %641 = vst [vmem:[#allocation20] sm:$0xff] %v637
    %v642 = vpack.c.bf16 %v639, %v639
    %v643 = vld [vmem:[#allocation12] sm:$0xff]
    %v644 = vld [vmem:[#allocation12 + $0x8] sm:$0xff]
    %v645 = vld [vmem:[#allocation12 + $0x10] sm:$0xff]
    %v646 = vld [vmem:[#allocation12 + $0x18] sm:$0xff]
    %v647 = vld [vmem:[#allocation12 + $0x20] sm:$0xff]
    %v648 = vld [vmem:[#allocation12 + $0x28] sm:$0xff]
    %v649 = vld [vmem:[#allocation12 + $0x30] sm:$0xff]
    %v650 = vld [vmem:[#allocation12 + $0x38] sm:$0xff]
    %v651 = vld [vmem:[#allocation12 + $0x40] sm:$0xff]
    %v652 = vld [vmem:[#allocation12 + $0x48] sm:$0xff]
    %v653 = vld [vmem:[#allocation12 + $0x50] sm:$0xff]
    %v654 = vld [vmem:[#allocation12 + $0x58] sm:$0xff]
    %v655 = vld [vmem:[#allocation12 + $0x60] sm:$0xff]
    %v656 = vld [vmem:[#allocation12 + $0x68] sm:$0xff]
    %v657 = vld [vmem:[#allocation12 + $0x70] sm:$0xff]
    %v658 = vld [vmem:[#allocation12 + $0x78] sm:$0xff]
    %v659 = vld [vmem:[#allocation12 + $0x80] sm:$0xff]
    %v660 = vld [vmem:[#allocation12 + $0x88] sm:$0xff]
    %v661 = vld [vmem:[#allocation12 + $0x90] sm:$0xff]
    %v662 = vld [vmem:[#allocation12 + $0x98] sm:$0xff]
    %v663 = vld [vmem:[#allocation12 + $0xa0] sm:$0xff]
    %v664 = vld [vmem:[#allocation12 + $0xa8] sm:$0xff]
    %v665 = vld [vmem:[#allocation12 + $0xb0] sm:$0xff]
    %v666 = vld [vmem:[#allocation12 + $0xb8] sm:$0xff]
    %v667 = vld [vmem:[#allocation12 + $0xc0] sm:$0xff]
    %v668 = vld [vmem:[#allocation12 + $0xc8] sm:$0xff]
    %v669 = vld [vmem:[#allocation12 + $0xd0] sm:$0xff]
    %v670 = vld [vmem:[#allocation12 + $0xd8] sm:$0xff]
    %v671 = vld [vmem:[#allocation12 + $0xe0] sm:$0xff]
    %v672 = vld [vmem:[#allocation12 + $0xe8] sm:$0xff]
    %v673 = vld [vmem:[#allocation12 + $0xf0] sm:$0xff]
    %v674 = vld [vmem:[#allocation12 + $0xf8] sm:$0xff]
    %v675 = vld [vmem:[%s6] sm:$0xf]
    %v677 = vlaneseq
    %v678 = vshrl.u32 %v677, 7
    %v679 = vsub.s32 0, %v678
    %v680 = vrot.slane %v675, %v679
    %v681 = vlaneseq
    %v682 = vshrl.u32 %v681, 7
    %v683 = vsub.s32 1, %v682
    %v684 = vrot.slane %v675, %v683
    %v685 = vlaneseq
    %v686 = vshrl.u32 %v685, 7
    %v687 = vsub.s32 2, %v686
    %v688 = vrot.slane %v675, %v687
    %v689 = vlaneseq
    %v690 = vshrl.u32 %v689, 7
    %v691 = vsub.s32 3, %v690
    %v692 = vrot.slane %v675, %v691
    %v729 = vunpack.c.l.b16 %v643
    %v730 = vunpack.c.h.b16 %v643
    %v731 = vunpack.c.l.b16 %v644
    %v732 = vunpack.c.h.b16 %v644
    %v733 = vunpack.c.l.b16 %v645
    %v734 = vunpack.c.h.b16 %v645
    %v735 = vunpack.c.l.b16 %v646
    %v736 = vunpack.c.h.b16 %v646
    %v737 = vunpack.c.l.b16 %v647
    %v738 = vunpack.c.h.b16 %v647
    %v739 = vunpack.c.l.b16 %v648
    %v740 = vunpack.c.h.b16 %v648
    %v741 = vunpack.c.l.b16 %v649
    %v742 = vunpack.c.h.b16 %v649
    %v743 = vunpack.c.l.b16 %v650
    %v744 = vunpack.c.h.b16 %v650
    %v745 = vunpack.c.l.b16 %v651
    %v746 = vunpack.c.h.b16 %v651
    %v747 = vunpack.c.l.b16 %v652
    %v748 = vunpack.c.h.b16 %v652
    %v749 = vunpack.c.l.b16 %v653
    %v750 = vunpack.c.h.b16 %v653
    %v751 = vunpack.c.l.b16 %v654
    %v752 = vunpack.c.h.b16 %v654
    %v753 = vunpack.c.l.b16 %v655
    %v754 = vunpack.c.h.b16 %v655
    %v755 = vunpack.c.l.b16 %v656
    %v756 = vunpack.c.h.b16 %v656
    %v757 = vunpack.c.l.b16 %v657
    %v758 = vunpack.c.h.b16 %v657
    %v759 = vunpack.c.l.b16 %v658
    %v760 = vunpack.c.h.b16 %v658
    %v761 = vunpack.c.l.b16 %v659
    %v762 = vunpack.c.h.b16 %v659
    %v763 = vunpack.c.l.b16 %v660
    %v764 = vunpack.c.h.b16 %v660
    %v765 = vunpack.c.l.b16 %v661
    %v766 = vunpack.c.h.b16 %v661
    %v767 = vunpack.c.l.b16 %v662
    %v768 = vunpack.c.h.b16 %v662
    %v769 = vunpack.c.l.b16 %v663
    %v770 = vunpack.c.h.b16 %v663
    %v771 = vunpack.c.l.b16 %v664
    %v772 = vunpack.c.h.b16 %v664
    %v773 = vunpack.c.l.b16 %v665
    %v774 = vunpack.c.h.b16 %v665
    %v775 = vunpack.c.l.b16 %v666
    %v776 = vunpack.c.h.b16 %v666
    %v777 = vunpack.c.l.b16 %v667
    %v778 = vunpack.c.h.b16 %v667
    %v779 = vunpack.c.l.b16 %v668
    %v780 = vunpack.c.h.b16 %v668
    %v781 = vunpack.c.l.b16 %v669
    %v782 = vunpack.c.h.b16 %v669
    %v783 = vunpack.c.l.b16 %v670
    %v784 = vunpack.c.h.b16 %v670
    %v785 = vunpack.c.l.b16 %v671
    %v786 = vunpack.c.h.b16 %v671
    %v787 = vunpack.c.l.b16 %v672
    %v788 = vunpack.c.h.b16 %v672
    %v789 = vunpack.c.l.b16 %v673
    %v790 = vunpack.c.h.b16 %v673
    %v791 = vunpack.c.l.b16 %v674
    %v792 = vunpack.c.h.b16 %v674
    %v793 = vpack.c.b16 %v733, %v729
    %v794 = vpack.c.b16 %v734, %v730
    %v795 = vpack.c.b16 %v735, %v731
    %v796 = vpack.c.b16 %v736, %v732
    %v797 = vpack.c.b16 %v741, %v737
    %v798 = vpack.c.b16 %v742, %v738
    %v799 = vpack.c.b16 %v743, %v739
    %v800 = vpack.c.b16 %v744, %v740
    %v801 = vpack.c.b16 %v749, %v745
    %v802 = vpack.c.b16 %v750, %v746
    %v803 = vpack.c.b16 %v751, %v747
    %v804 = vpack.c.b16 %v752, %v748
    %v805 = vpack.c.b16 %v757, %v753
    %v806 = vpack.c.b16 %v758, %v754
    %v807 = vpack.c.b16 %v759, %v755
    %v808 = vpack.c.b16 %v760, %v756
    %v809 = vpack.c.b16 %v765, %v761
    %v810 = vpack.c.b16 %v766, %v762
    %v811 = vpack.c.b16 %v767, %v763
    %v812 = vpack.c.b16 %v768, %v764
    %v813 = vpack.c.b16 %v773, %v769
    %v814 = vpack.c.b16 %v774, %v770
    %v815 = vpack.c.b16 %v775, %v771
    %v816 = vpack.c.b16 %v776, %v772
    %v817 = vpack.c.b16 %v781, %v777
    %v818 = vpack.c.b16 %v782, %v778
    %v819 = vpack.c.b16 %v783, %v779
    %v820 = vpack.c.b16 %v784, %v780
    %v821 = vpack.c.b16 %v789, %v785
    %v822 = vpack.c.b16 %v790, %v786
    %v823 = vpack.c.b16 %v791, %v787
    %v824 = vpack.c.b16 %v792, %v788
    %857 = vmatprep.subr.bf16.mxu0 %v794
    %858 = vmatpush1.bf16.msra.mxu0 %v793
    %859 = vmatprep.subr.bf16.mxu0 %v798
    %860 = vmatpush1.bf16.msra.mxu0 %v797
    %861 = vmatprep.subr.bf16.mxu0 %v802
    %862 = vmatpush1.bf16.msra.mxu0 %v801
    %863 = vmatprep.subr.bf16.mxu0 %v806
    %864 = vmatpush1.bf16.msra.mxu0 %v805
    %865 = vmatprep.subr.bf16.mxu0 %v810
    %866 = vmatpush1.bf16.msra.mxu0 %v809
    %867 = vmatprep.subr.bf16.mxu0 %v814
    %868 = vmatpush1.bf16.msra.mxu0 %v813
    %869 = vmatprep.subr.bf16.mxu0 %v818
    %870 = vmatpush1.bf16.msra.mxu0 %v817
    %871 = vmatprep.subr.bf16.mxu0 %v822
    %872 = vmatpush1.bf16.msra.mxu0 %v821
    %873 = vmatprep.subr.bf16.mxu0 0
    %874 = vmatpush1.bf16.msra.mxu0 0
    %875 = vmatprep.subr.bf16.mxu0 0
    %876 = vmatpush1.bf16.msra.mxu0 0
    %877 = vmatprep.subr.bf16.mxu0 0
    %878 = vmatpush1.bf16.msra.mxu0 0
    %879 = vmatprep.subr.bf16.mxu0 0
    %880 = vmatpush1.bf16.msra.mxu0 0
    %881 = vmatprep.subr.bf16.mxu0 0
    %882 = vmatpush1.bf16.msra.mxu0 0
    %883 = vmatprep.subr.bf16.mxu0 0
    %884 = vmatpush1.bf16.msra.mxu0 0
    %885 = vmatprep.subr.bf16.mxu0 0
    %886 = vmatpush1.bf16.msra.mxu0 0
    %887 = vmatprep.subr.bf16.mxu0 0
    %888 = vmatpush1.bf16.msra.mxu0 0
    %889 = vmatprep.mubr.bf16.mxu0 0
    %890 = vmatmul.mubr.bf16.gmra.mrb[0].mxu0 %v642
    %v891 = vpop.f32.mrb[0].mxu0
    %v892 = vadd.f32 %v680, %v891
    %v893 = vpop.f32.mrb[0].mxu0
    %v894 = vadd.f32 %v684, %v893
    %v895 = vpop.f32.mrb[0].mxu0
    %v896 = vpop.f32.mrb[0].mxu0
    %897 = vdwg.mxu0
    %898 = vmatprep.subr.bf16.mxu0 %v796
    %899 = vmatpush1.bf16.msra.mxu0 %v795
    %900 = vmatprep.subr.bf16.mxu0 %v800
    %901 = vmatpush1.bf16.msra.mxu0 %v799
    %902 = vmatprep.subr.bf16.mxu0 %v804
    %903 = vmatpush1.bf16.msra.mxu0 %v803
    %904 = vmatprep.subr.bf16.mxu0 %v808
    %905 = vmatpush1.bf16.msra.mxu0 %v807
    %906 = vmatprep.subr.bf16.mxu0 %v812
    %907 = vmatpush1.bf16.msra.mxu0 %v811
    %908 = vmatprep.subr.bf16.mxu0 %v816
    %909 = vmatpush1.bf16.msra.mxu0 %v815
    %910 = vmatprep.subr.bf16.mxu0 %v820
    %911 = vmatpush1.bf16.msra.mxu0 %v819
    %912 = vmatprep.subr.bf16.mxu0 %v824
    %913 = vmatpush1.bf16.msra.mxu0 %v823
    %914 = vmatprep.subr.bf16.mxu0 0
    %915 = vmatpush1.bf16.msra.mxu0 0
    %916 = vmatprep.subr.bf16.mxu0 0
    %917 = vmatpush1.bf16.msra.mxu0 0
    %918 = vmatprep.subr.bf16.mxu0 0
    %919 = vmatpush1.bf16.msra.mxu0 0
    %920 = vmatprep.subr.bf16.mxu0 0
    %921 = vmatpush1.bf16.msra.mxu0 0
    %922 = vmatprep.subr.bf16.mxu0 0
    %923 = vmatpush1.bf16.msra.mxu0 0
    %924 = vmatprep.subr.bf16.mxu0 0
    %925 = vmatpush1.bf16.msra.mxu0 0
    %926 = vmatprep.subr.bf16.mxu0 0
    %927 = vmatpush1.bf16.msra.mxu0 0
    %928 = vmatprep.subr.bf16.mxu0 0
    %929 = vmatpush1.bf16.msra.mxu0 0
    %930 = vmatprep.mubr.bf16.mxu0 0
    %931 = vmatmul.mubr.bf16.gmra.mrb[0].mxu0 %v642
    %v932 = vpop.f32.mrb[0].mxu0
    %v933 = vadd.f32 %v688, %v932
    %v934 = vpop.f32.mrb[0].mxu0
    %v935 = vadd.f32 %v692, %v934
    %v936 = vpop.f32.mrb[0].mxu0
    %v937 = vpop.f32.mrb[0].mxu0
    %938 = vdwg.mxu0
    %939 = vst [vmem:[#allocation17] sm:$0xff] %v892
    %940 = vst [vmem:[#allocation17 + $0x8] sm:$0xff] %v894
    %941 = vst [vmem:[#allocation17 + $0x10] sm:$0xff] %v933
    %942 = vst [vmem:[#allocation17 + $0x18] sm:$0xff] %v935
    // Predicated region
    $region54: #{decoder_forward.1} parent=1 // pred_check
      _
    $region55: #{decoder_forward.1} parent=1 // pred_check_branch
      %944 = sbr.rel (0) target = $region57
    $region56: #{decoder_forward.1} parent=1 // pred_region
      %s946 = ssub.s32 512, 512
      %947 = vsyncadd [#allocation7], %s946
      %s949 = sshll.u32 [#allocation17], 4
      %s950 = int_to_ptr.vmem [resolvable:$true] %s949
      %952 = dma.vmem_to_hbm [thread:$0]  %s950, 512, %s9, [#allocation7]
    $region57: #{decoder_forward.1} parent=1 // pred_fallthru
      _
    // Predicated region
    $region58: #{decoder_forward.1} parent=1 // pred_check
      _
    $region59: #{decoder_forward.1} parent=1 // pred_check_branch
      %954 = sbr.rel (0) target = $region61
    $region60: #{decoder_forward.1} parent=1 // pred_region
      %s956 = ssub.s32 128, 128
      %957 = vsyncadd [#allocation19], %s956
      %s959 = sshll.u32 [#allocation18], 4
      %s960 = int_to_ptr.vmem [resolvable:$true] %s959
      %962 = dma.vmem_to_hbm [thread:$0]  %s960, 128, %s10, [#allocation19]
    $region61: #{decoder_forward.1} parent=1 // pred_fallthru
      _
    // Predicated region
    $region62: #{decoder_forward.1} parent=1 // pred_check
      _
    $region63: #{decoder_forward.1} parent=1 // pred_check_branch
      %964 = sbr.rel (0) target = $region65
    $region64: #{decoder_forward.1} parent=1 // pred_region
      %s966 = ssub.s32 128, 128
      %967 = vsyncadd [#allocation19], %s966
      %s969 = sshll.u32 [#allocation20], 4
      %s970 = int_to_ptr.vmem [resolvable:$true] %s969
      %972 = dma.vmem_to_hbm [thread:$0]  %s970, 128, %s11, [#allocation19]
    $region65: #{decoder_forward.1} parent=1 // pred_fallthru
      _
    // Predicated region
    $region66: #{decoder_forward.1} parent=1 // pred_check
      _
    $region67: #{decoder_forward.1} parent=1 // pred_check_branch
      %974 = sbr.rel (0) target = $region69
    $region68: #{decoder_forward.1} parent=1 // pred_region
      %975 = dma.done [#allocation7], 512
    $region69: #{decoder_forward.1} parent=1 // pred_fallthru
      _
    // Predicated region
    $region70: #{decoder_forward.1} parent=1 // pred_check
      _
    $region71: #{decoder_forward.1} parent=1 // pred_check_branch
      %977 = sbr.rel (0) target = $region73
    $region72: #{decoder_forward.1} parent=1 // pred_region
      %978 = dma.done [#allocation19], 128
    $region73: #{decoder_forward.1} parent=1 // pred_fallthru
      _
    // Predicated region
    $region74: #{decoder_forward.1} parent=1 // pred_check
      _
    $region75: #{decoder_forward.1} parent=1 // pred_check_branch
      %980 = sbr.rel (0) target = $region77
    $region76: #{decoder_forward.1} parent=1 // pred_region
      %981 = dma.done [#allocation19], 128
    $region77: #{decoder_forward.1} parent=1 // pred_fallthru
      _
    %982 = vsyncpa [#allocation6], 1
    %983 = vsyncpa [#allocation13], 1
    %984 = vsyncpa [#allocation16], 1
    %985 = vsyncpa [#allocation7], 1
    %986 = vsyncpa [#allocation19], 1
    %987 = vsyncpa [#allocation8], 1
    %988 = vsyncpa [#allocation10], 1
  %989 = vsyncmov [#allocation4]
  %s990 = vpop.sfrf %989
  %p991 = scmp.eq.s32.totalorder %s990, 0
  %p992 = pneg %p991
  %994 = shalt.err (%p992)
  %s995 = scalar_lea.sflag [#allocation4], 1
  %996 = vsyncmov %s995
  %s997 = vpop.sfrf %996
  %p998 = scmp.eq.s32.totalorder %s997, 0
  %p999 = pneg %p998
  %1001 = shalt.err (%p999)

</llo_original>
